<compile_context>
chip_gen: v7x
topology: tpu7x:2x2x1
jax: 0.10.0
libtpu: 0.0.40
codegen_flags: <defaults>
</compile_context>

<pallas_src>
import functools
import math

import jax
import jax.numpy as jnp
from jax.experimental import pallas as pl
from jax.experimental.pallas import tpu as pltpu


def _round_up(x: int, m: int) -> int:
    return (x + m - 1) // m * m


# ---------------------------------------------------------------------------
# Kernels
# ---------------------------------------------------------------------------
def _qkv_proj_kernel(x_ref, w_ref, b_ref, y_ref, acc_ref):
    # x_ref: (tl, tk)   w_ref: (tk, D)   b_ref: (1, D)   y_ref: (tl, D)
    kk = pl.program_id(2)

    @pl.when(kk == 0)
    def _():
        acc_ref[...] = jnp.zeros(acc_ref.shape, acc_ref.dtype)

    acc_ref[...] += jnp.dot(x_ref[...], w_ref[...],
                            preferred_element_type=jnp.float32)

    @pl.when(kk == pl.num_programs(2) - 1)
    def _():
        y_ref[...] = (acc_ref[...] + b_ref[...].astype(jnp.float32)).astype(y_ref.dtype)


def _norm_rope_kernel(q_ref, k_ref, cos_ref, sin_ref, qs_ref, ks_ref, p_ref,
                      qo_ref, ko_ref, *, sm_scale):
    # q_ref/k_ref: (tl, D)   cos/sin: (tl, D)   scales: (1, D)   p_ref: (D, D)
    cos = cos_ref[...]
    sin = sin_ref[...]
    pmat = p_ref[...]

    def _norm_rope(x, scale):
        xf = x.astype(jnp.float32)
        rrms = jax.lax.rsqrt(jnp.mean(xf * xf, axis=-1, keepdims=True) + 1e-6)
        xn = xf * rrms * scale                      # RMSNorm (eps=1e-6) * scale
        # pair rotation rot[2d] = -x[2d+1], rot[2d+1] = x[2d] via tiny MXU matmul
        rot = jnp.dot(xn, pmat, preferred_element_type=jnp.float32)
        return cos * xn + sin * rot                 # RoPE

    qo_ref[...] = (_norm_rope(q_ref[...], qs_ref[...]) * sm_scale).astype(qo_ref.dtype)
    ko_ref[...] = _norm_rope(k_ref[...], ks_ref[...]).astype(ko_ref.dtype)


def _flash_attn_kernel(q_ref, k_ref, v_ref, o_ref, m_sc, l_sc, acc_sc,
                       *, l_valid, tk, need_mask):
    # q_ref: (tq, D)  k_ref/v_ref: (tk, D)  o_ref: (tq, D)
    ki = pl.program_id(3)

    @pl.when(ki == 0)
    def _():
        m_sc[...] = jnp.full(m_sc.shape, -jnp.inf, m_sc.dtype)
        l_sc[...] = jnp.zeros(l_sc.shape, l_sc.dtype)
        acc_sc[...] = jnp.zeros(acc_sc.shape, acc_sc.dtype)

    # q already carries the 1/sqrt(D) softmax scale (folded in _norm_rope_kernel)
    s = jnp.dot(q_ref[...], k_ref[...].T, preferred_element_type=jnp.float32)
    if need_mask:  # mask padded keys (static trace-time flag)
        col = ki * tk + jax.lax.broadcasted_iota(jnp.int32, s.shape, 1)
        s = jnp.where(col < l_valid, s, -1e30)

    m_prev = m_sc[...]
    m_new = jnp.maximum(m_prev, s.max(axis=-1, keepdims=True))
    alpha = jnp.exp(m_prev - m_new)
    p = jnp.exp(s - m_new)
    l_sc[...] = alpha * l_sc[...] + p.sum(axis=-1, keepdims=True)
    acc_sc[...] = alpha * acc_sc[...] + jnp.dot(
        p.astype(v_ref.dtype), v_ref[...], preferred_element_type=jnp.float32)
    m_sc[...] = m_new

    @pl.when(ki == pl.num_programs(3) - 1)
    def _():
        o_ref[...] = (acc_sc[...] / l_sc[...]).astype(o_ref.dtype)


def _merge_proj_kernel(a_ref, w_ref, b_ref, o_ref, acc_ref):
    # a_ref: (tl, D)   w_ref: (D, tn)   b_ref: (1, tn)   o_ref: (tl, tn)
    h = pl.program_id(3)

    @pl.when(h == 0)
    def _():
        acc_ref[...] = jnp.zeros(acc_ref.shape, acc_ref.dtype)

    acc_ref[...] += jnp.dot(a_ref[...], w_ref[...],
                            preferred_element_type=jnp.float32)

    @pl.when(h == pl.num_programs(3) - 1)
    def _():
        o_ref[...] = (acc_ref[...] + b_ref[...].astype(jnp.float32)).astype(o_ref.dtype)


# ---------------------------------------------------------------------------
# Forward pass
# ---------------------------------------------------------------------------
@functools.partial(jax.jit, static_argnums=(8,))
def self_attention_forward(x, pe, w_qkv, b_qkv, q_scale, k_scale,
                           w_proj, b_proj, num_heads):
    B, L, dim = x.shape
    H = num_heads
    D = dim // H
    G = 3 * H
    sm_scale = 1.0 / math.sqrt(D)

    # sequence tiling (lane-dense (tl, D) blocks everywhere)
    tl = 128 if L >= 128 else _round_up(L, 8)
    Lp = _round_up(L, tl)
    Lt = Lp // tl

    xp = x if Lp == L else jnp.pad(x, ((0, 0), (0, Lp - L), (0, 0)))
    x2d = xp.reshape(B * Lp, dim)

    # ---- 1) QKV projection (batched over the 3*H head slabs) ---------------
    K = dim
    if K <= 1024:
        tk_mm, Kp = K, K
    else:
        tk_mm = 512
        Kp = _round_up(K, tk_mm)
        x2d = jnp.pad(x2d, ((0, 0), (0, Kp - K)))
    # torch Linear: y = x @ W^T ; W rows ordered (K H D) -> per-slab (K_in, D)
    w_qkv_r = w_qkv.reshape(G, D, dim).transpose(0, 2, 1)          # (G, K, D)
    if Kp != K:
        w_qkv_r = jnp.pad(w_qkv_r, ((0, 0), (0, Kp - K), (0, 0)))
    if b_qkv is None:
        b_qkv_r = jnp.zeros((G, 1, D), x.dtype)
    else:
        b_qkv_r = b_qkv.reshape(G, 1, D).astype(x.dtype)

    Mt = (B * Lp) // tl
    Kt = Kp // tk_mm
    qkv = pl.pallas_call(
        _qkv_proj_kernel,
        out_shape=jax.ShapeDtypeStruct((G, B * Lp, D), x.dtype),
        grid=(G, Mt, Kt),
        in_specs=[
            pl.BlockSpec((tl, tk_mm), lambda g, i, kk: (i, kk)),
            pl.BlockSpec((None, tk_mm, D), lambda g, i, kk: (g, kk, 0)),
            pl.BlockSpec((None, 1, D), lambda g, i, kk: (g, 0, 0)),
        ],
        out_specs=pl.BlockSpec((None, tl, D), lambda g, i, kk: (g, i, 0)),
        scratch_shapes=[pltpu.VMEM((tl, D), jnp.float32)],
        compiler_params=pltpu.CompilerParams(
            dimension_semantics=("parallel", "parallel", "arbitrary")),
    )(x2d, w_qkv_r, b_qkv_r)
    qkv5 = qkv.reshape(3, H, B, Lp, D)          # free reshape, no data movement

    # ---- 2) RoPE coefficients from pe (tiny, pe-only glue) ------------------
    # out[2d]   = pe[...,d,0,0]*x[2d] + pe[...,d,0,1]*x[2d+1]
    # out[2d+1] = pe[...,d,1,0]*x[2d] + pe[...,d,1,1]*x[2d+1]
    # expressed as cos2*x + sin2*rot(x) with rot = pairwise (-odd, even)
    c_even = pe[:, 0, :, :, 0, 0]
    c_odd = pe[:, 0, :, :, 1, 1]
    s_even = -pe[:, 0, :, :, 0, 1]
    s_odd = pe[:, 0, :, :, 1, 0]
    cos2 = jnp.stack([c_even, c_odd], axis=-1).reshape(B, L, D).astype(jnp.float32)
    sin2 = jnp.stack([s_even, s_odd], axis=-1).reshape(B, L, D).astype(jnp.float32)
    if Lp != L:
        cos2 = jnp.pad(cos2, ((0, 0), (0, Lp - L), (0, 0)))
        sin2 = jnp.pad(sin2, ((0, 0), (0, Lp - L), (0, 0)))

    idx = jnp.arange(D)
    partner = jnp.where(idx % 2 == 0, idx + 1, idx - 1)
    sign = jnp.where(idx % 2 == 0, 1.0, -1.0).astype(jnp.float32)
    P = jnp.zeros((D, D), jnp.float32).at[idx, partner].set(sign)

    # ---- 3) fused RMSNorm + RoPE (+ q pre-scale) ----------------------------
    qn, kn = pl.pallas_call(
        functools.partial(_norm_rope_kernel, sm_scale=sm_scale),
        out_shape=(jax.ShapeDtypeStruct((B, H, Lp, D), x.dtype),
                   jax.ShapeDtypeStruct((B, H, Lp, D), x.dtype)),
        grid=(B, H, Lt),
        in_specs=[
            pl.BlockSpec((None, None, None, tl, D), lambda b, h, i: (0, h, b, i, 0)),
            pl.BlockSpec((None, None, None, tl, D), lambda b, h, i: (1, h, b, i, 0)),
            pl.BlockSpec((None, tl, D), lambda b, h, i: (b, i, 0)),
            pl.BlockSpec((None, tl, D), lambda b, h, i: (b, i, 0)),
            pl.BlockSpec((1, D), lambda b, h, i: (0, 0)),
            pl.BlockSpec((1, D), lambda b, h, i: (0, 0)),
            pl.BlockSpec((D, D), lambda b, h, i: (0, 0)),
        ],
        out_specs=(pl.BlockSpec((None, None, tl, D), lambda b, h, i: (b, h, i, 0)),
                   pl.BlockSpec((None, None, tl, D), lambda b, h, i: (b, h, i, 0))),
        compiler_params=pltpu.CompilerParams(
            dimension_semantics=("parallel", "parallel", "parallel")),
    )(qkv5, qkv5, cos2, sin2,
      q_scale.reshape(1, D).astype(jnp.float32),
      k_scale.reshape(1, D).astype(jnp.float32), P)

    # ---- 4) flash attention -------------------------------------------------
    o = pl.pallas_call(
        functools.partial(_flash_attn_kernel, l_valid=L, tk=tl,
                          need_mask=(Lp != L)),
        out_shape=jax.ShapeDtypeStruct((B, H, Lp, D), x.dtype),
        grid=(B, H, Lt, Lt),
        in_specs=[
            pl.BlockSpec((None, None, tl, D), lambda b, h, qi, ki: (b, h, qi, 0)),
            pl.BlockSpec((None, None, tl, D), lambda b, h, qi, ki: (b, h, ki, 0)),
            pl.BlockSpec((None, None, None, tl, D),
                         lambda b, h, qi, ki: (2, h, b, ki, 0)),   # v straight from qkv
        ],
        out_specs=pl.BlockSpec((None, None, tl, D), lambda b, h, qi, ki: (b, h, qi, 0)),
        scratch_shapes=[pltpu.VMEM((tl, 1), jnp.float32),
                        pltpu.VMEM((tl, 1), jnp.float32),
                        pltpu.VMEM((tl, D), jnp.float32)],
        compiler_params=pltpu.CompilerParams(
            dimension_semantics=("parallel", "parallel", "parallel", "arbitrary")),
    )(qn, kn, qkv5)

    # ---- 5) head-merge + output projection (fused) --------------------------
    N = dim
    if N <= 512:
        tn, Np = N, N
    else:
        tn = 512
        Np = _round_up(N, tn)
    w_proj_r = w_proj.T.reshape(H, D, N)                    # (H, D, dim)
    b_proj_r = b_proj.reshape(1, N).astype(x.dtype)
    if Np != N:
        w_proj_r = jnp.pad(w_proj_r, ((0, 0), (0, 0), (0, Np - N)))
        b_proj_r = jnp.pad(b_proj_r, ((0, 0), (0, Np - N)))

    out = pl.pallas_call(
        _merge_proj_kernel,
        out_shape=jax.ShapeDtypeStruct((B, Lp, Np), x.dtype),
        grid=(B, Lt, Np // tn, H),
        in_specs=[
            pl.BlockSpec((None, None, tl, D), lambda b, i, j, h: (b, h, i, 0)),
            pl.BlockSpec((None, D, tn), lambda b, i, j, h: (h, 0, j)),
            pl.BlockSpec((1, tn), lambda b, i, j, h: (0, j)),
        ],
        out_specs=pl.BlockSpec((None, tl, tn), lambda b, i, j, h: (b, i, j)),
        scratch_shapes=[pltpu.VMEM((tl, tn), jnp.float32)],
        compiler_params=pltpu.CompilerParams(
            dimension_semantics=("parallel", "parallel", "parallel", "arbitrary")),
    )(o, w_proj_r, b_proj_r)

    if Lp != L or Np != N:
        out = out[:, :L, :N]
    return out


# ---------------------------------------------------------------------------
# Module wrapper + pure-JAX reference
# ---------------------------------------------------------------------------
class SelfAttention:
    def __init__(self, dim: int, num_heads: int = 8, qkv_bias: bool = False, *, key):
        assert dim % num_heads == 0
        head_dim = dim // num_heads
        assert head_dim % 2 == 0
        self.dim = dim
        self.num_heads = num_heads
        ks = jax.random.split(key, 6)
        s = 1.0 / math.sqrt(dim)
        self.w_qkv = jax.random.normal(ks[0], (3 * dim, dim), jnp.float32) * s
        self.b_qkv = (jax.random.normal(ks[1], (3 * dim,), jnp.float32) * 0.02
                      if qkv_bias else None)
        self.q_scale = 1.0 + 0.1 * jax.random.normal(ks[2], (head_dim,), jnp.float32)
        self.k_scale = 1.0 + 0.1 * jax.random.normal(ks[3], (head_dim,), jnp.float32)
        self.w_proj = jax.random.normal(ks[4], (dim, dim), jnp.float32) * s
        self.b_proj = jax.random.normal(ks[5], (dim,), jnp.float32) * 0.02

    def __call__(self, x, pe):
        return self_attention_forward(x, pe, self.w_qkv, self.b_qkv,
                                      self.q_scale, self.k_scale,
                                      self.w_proj, self.b_proj, self.num_heads)


def _reference(x, pe, m: SelfAttention):
    B, L, dim = x.shape
    H = m.num_heads
    D = dim // H
    hp = jax.lax.Precision.HIGHEST
    qkv = jnp.einsum("ble,oe->blo", x, m.w_qkv, precision=hp)
    if m.b_qkv is not None:
        qkv = qkv + m.b_qkv
    qkv = qkv.reshape(B, L, 3, H, D).transpose(2, 0, 3, 1, 4)    # K B H L D
    q, k, v = qkv[0], qkv[1], qkv[2]

    def rms(t, scale):
        rrms = jax.lax.rsqrt(jnp.mean(t.astype(jnp.float32) ** 2,
                                      axis=-1, keepdims=True) + 1e-6)
        return (t * rrms) * scale

    q, k = rms(q, m.q_scale), rms(k, m.k_scale)

    def rope(t):
        t_ = t.reshape(B, H, L, D // 2, 1, 2)
        out = pe[..., 0] * t_[..., 0] + pe[..., 1] * t_[..., 1]
        return out.reshape(B, H, L, D)

    q, k = rope(q), rope(k)
    s = jnp.einsum("bhqd,bhkd->bhqk", q, k, precision=hp) / math.sqrt(D)
    p = jax.nn.softmax(s, axis=-1)
    o = jnp.einsum("bhqk,bhkd->bhqd", p, v, precision=hp)
    o = o.transpose(0, 2, 1, 3).reshape(B, L, dim)
    return jnp.einsum("ble,oe->blo", o, m.w_proj, precision=hp) + m.b_proj


if __name__ == "__main__":
    root = jax.random.PRNGKey(0)

    def run_case(case_key, B, L, dim, H, qkv_bias):
        D = dim // H
        kx, kpe, kp = jax.random.split(case_key, 3)
        x = jax.random.normal(kx, (B, L, dim), jnp.float32)
        ang = jax.random.uniform(kpe, (B, 1, L, D // 2), jnp.float32,
                                 0.0, 2.0 * math.pi)
        pe = jnp.stack([jnp.cos(ang), -jnp.sin(ang), jnp.sin(ang), jnp.cos(ang)],
                       axis=-1).reshape(B, 1, L, D // 2, 2, 2)
        module = SelfAttention(dim=dim, num_heads=H, qkv_bias=qkv_bias, key=kp)
        out = jax.block_until_ready(module(x, pe))
        assert out.shape == (B, L, dim) and out.dtype == jnp.float32
        assert bool(jnp.all(jnp.isfinite(out)))
        ref = _reference(x, pe, module)
        assert jnp.allclose(out, ref, atol=2e-3, rtol=2e-3), \
            float(jnp.max(jnp.abs(out - ref)))

    k1, k2 = jax.random.split(root, 2)
    run_case(k1, B=2, L=8, dim=32, H=2, qkv_bias=False)     # tiny single-tile path
    run_case(k2, B=1, L=160, dim=64, H=4, qkv_bias=True)    # multi-tile + masked tail
    print("KERNEL_OK")
</pallas_src>

<mosaic_0001>
module attributes {stable_mosaic.version = 11 : i64} {
  func.func @_qkv_proj_kernel(%arg0: i32, %arg1: i32, %arg2: i32, %arg3: memref<8x32xf32, #tpu.memory_space<vmem>>, %arg4: memref<1x32x16xf32, #tpu.memory_space<vmem>>, %arg5: memref<1x1x16xf32, #tpu.memory_space<vmem>>, %arg6: memref<1x8x16xf32, #tpu.memory_space<vmem>>, %arg7: memref<8x16xf32, #tpu.memory_space<vmem>>) attributes {dimension_semantics = [#tpu.dimension_semantics<parallel>, #tpu.dimension_semantics<parallel>, #tpu.dimension_semantics<arbitrary>], iteration_bounds = array<i64: 6, 2, 1>, scalar_prefetch = 0 : i64, scratch_operands = 1 : i64, tpu.core_type = #tpu.core_type<tc>, window_params = [{transform_indices = @transform_0, window_bounds = array<i64: 8, 32>}, {transform_indices = @transform_1, window_bounds = array<i64: 1, 32, 16>}, {transform_indices = @transform_2, window_bounds = array<i64: 1, 1, 16>}, {transform_indices = @transform_3, window_bounds = array<i64: 1, 8, 16>}]} {
    %c0_i32 = arith.constant 0 : i32
    %0 = arith.cmpi eq, %arg2, %c0_i32 : i32
    %1 = arith.extui %0 : i1 to i32
    %c0_i32_0 = arith.constant 0 : i32
    %2 = arith.cmpi ne, %1, %c0_i32_0 : i32
    scf.if %2 {
      %cst_11 = arith.constant 0.000000e+00 : f32
      %13 = vector.broadcast %cst_11 : f32 to vector<8x16xf32>
      %c0_12 = arith.constant 0 : index
      %c0_13 = arith.constant 0 : index
      %14 = vector.load %arg7[%c0_12, %c0_13] : memref<8x16xf32, #tpu.memory_space<vmem>>, vector<8x16xf32>
      tpu.vector_store %arg7[%c0_12, %c0_13], %13 {strides = array<i32>} : memref<8x16xf32, #tpu.memory_space<vmem>>, vector<8x16xf32>,
    } else {
    }
    %c0 = arith.constant 0 : index
    %c0_1 = arith.constant 0 : index
    %3 = vector.load %arg7[%c0, %c0_1] : memref<8x16xf32, #tpu.memory_space<vmem>>, vector<8x16xf32>
    %c0_2 = arith.constant 0 : index
    %c0_3 = arith.constant 0 : index
    %4 = vector.load %arg3[%c0_2, %c0_3] : memref<8x32xf32, #tpu.memory_space<vmem>>, vector<8x32xf32>
    %c0_4 = arith.constant 0 : index
    %c0_5 = arith.constant 0 : index
    %c0_6 = arith.constant 0 : index
    %5 = vector.load %arg4[%c0_4, %c0_5, %c0_6] : memref<1x32x16xf32, #tpu.memory_space<vmem>>, vector<1x32x16xf32>
    %6 = vector.shape_cast %5 : vector<1x32x16xf32> to vector<32x16xf32>
    %cst = arith.constant dense<0.000000e+00> : vector<8x16xf32>
    %7 = tpu.matmul %4, %6, %cst {dimension_numbers = #tpu.dot_dimension_numbers<[1], [0], [0], [1], [0, 0, 1, 1], [], []>} : vector<8x32xf32>, vector<32x16xf32>, vector<8x16xf32> -> vector<8x16xf32>
    %8 = arith.addf %3, %7 : vector<8x16xf32>
    %c0_7 = arith.constant 0 : index
    %c0_8 = arith.constant 0 : index
    %9 = vector.load %arg7[%c0_7, %c0_8] : memref<8x16xf32, #tpu.memory_space<vmem>>, vector<8x16xf32>
    tpu.vector_store %arg7[%c0_7, %c0_8], %8 {strides = array<i32>} : memref<8x16xf32, #tpu.memory_space<vmem>>, vector<8x16xf32>,
    %c0_i32_9 = arith.constant 0 : i32
    %10 = arith.cmpi eq, %arg2, %c0_i32_9 : i32
    %11 = arith.extui %10 : i1 to i32
    %c0_i32_10 = arith.constant 0 : i32
    %12 = arith.cmpi ne, %11, %c0_i32_10 : i32
    scf.if %12 {
      %c0_11 = arith.constant 0 : index
      %c0_12 = arith.constant 0 : index
      %13 = vector.load %arg7[%c0_11, %c0_12] : memref<8x16xf32, #tpu.memory_space<vmem>>, vector<8x16xf32>
      %c0_13 = arith.constant 0 : index
      %c0_14 = arith.constant 0 : index
      %c0_15 = arith.constant 0 : index
      %14 = vector.load %arg5[%c0_13, %c0_14, %c0_15] : memref<1x1x16xf32, #tpu.memory_space<vmem>>, vector<1x1x16xf32>
      %15 = vector.shape_cast %14 : vector<1x1x16xf32> to vector<1x16xf32>
      %16 = vector.broadcast %15 : vector<1x16xf32> to vector<8x16xf32>
      %17 = arith.addf %13, %16 : vector<8x16xf32>
      %c0_16 = arith.constant 0 : index
      %c0_17 = arith.constant 0 : index
      %c0_18 = arith.constant 0 : index
      %18 = vector.load %arg6[%c0_16, %c0_17, %c0_18] : memref<1x8x16xf32, #tpu.memory_space<vmem>>, vector<1x8x16xf32>
      %19 = vector.shape_cast %18 : vector<1x8x16xf32> to vector<8x16xf32>
      %20 = vector.shape_cast %17 : vector<8x16xf32> to vector<1x8x16xf32>
      tpu.vector_store %arg6[%c0_16, %c0_17, %c0_18], %20 {strides = array<i32>} : memref<1x8x16xf32, #tpu.memory_space<vmem>>, vector<1x8x16xf32>,
    } else {
    }
    return
  }
  func.func @transform_0(%arg0: i32, %arg1: i32, %arg2: i32) -> (i32, i32) {
    %c0_i32 = arith.constant 0 : i32
    return %arg1, %arg2 : i32, i32
  }
  func.func @transform_1(%arg0: i32, %arg1: i32, %arg2: i32) -> (i32, i32, i32) {
    %c0_i32 = arith.constant 0 : i32
    %c0_i32_0 = arith.constant 0 : i32
    return %arg0, %arg2, %c0_i32 : i32, i32, i32
  }
  func.func @transform_2(%arg0: i32, %arg1: i32, %arg2: i32) -> (i32, i32, i32) {
    %c0_i32 = arith.constant 0 : i32
    %c0_i32_0 = arith.constant 0 : i32
    %c0_i32_1 = arith.constant 0 : i32
    return %arg0, %c0_i32, %c0_i32_0 : i32, i32, i32
  }
  func.func @transform_3(%arg0: i32, %arg1: i32, %arg2: i32) -> (i32, i32, i32) {
    %c0_i32 = arith.constant 0 : i32
    %c0_i32_0 = arith.constant 0 : i32
    return %arg0, %arg1, %c0_i32 : i32, i32, i32
  }
}

module attributes {stable_mosaic.version = 11 : i64} {
  func.func @_norm_rope_kernel(%arg0: i32, %arg1: i32, %arg2: i32, %arg3: memref<1x1x1x8x16xf32, #tpu.memory_space<vmem>>, %arg4: memref<1x1x1x8x16xf32, #tpu.memory_space<vmem>>, %arg5: memref<1x8x16xf32, #tpu.memory_space<vmem>>, %arg6: memref<1x8x16xf32, #tpu.memory_space<vmem>>, %arg7: memref<1x16xf32, #tpu.memory_space<vmem>>, %arg8: memref<1x16xf32, #tpu.memory_space<vmem>>, %arg9: memref<16x16xf32, #tpu.memory_space<vmem>>, %arg10: memref<1x1x8x16xf32, #tpu.memory_space<vmem>>, %arg11: memref<1x1x8x16xf32, #tpu.memory_space<vmem>>) attributes {dimension_semantics = [#tpu.dimension_semantics<parallel>, #tpu.dimension_semantics<parallel>, #tpu.dimension_semantics<parallel>], iteration_bounds = array<i64: 2, 2, 1>, scalar_prefetch = 0 : i64, scratch_operands = 0 : i64, tpu.core_type = #tpu.core_type<tc>, window_params = [{transform_indices = @transform_0, window_bounds = array<i64: 1, 1, 1, 8, 16>}, {transform_indices = @transform_1, window_bounds = array<i64: 1, 1, 1, 8, 16>}, {transform_indices = @transform_2, window_bounds = array<i64: 1, 8, 16>}, {transform_indices = @transform_3, window_bounds = array<i64: 1, 8, 16>}, {pipeline_mode = #tpu.pipeline_mode<synchronous>, transform_indices = @transform_4, window_bounds = array<i64: 1, 16>}, {pipeline_mode = #tpu.pipeline_mode<synchronous>, transform_indices = @transform_5, window_bounds = array<i64: 1, 16>}, {pipeline_mode = #tpu.pipeline_mode<synchronous>, transform_indices = @transform_6, window_bounds = array<i64: 16, 16>}, {transform_indices = @transform_7, window_bounds = array<i64: 1, 1, 8, 16>}, {transform_indices = @transform_8, window_bounds = array<i64: 1, 1, 8, 16>}]} {
    %c0 = arith.constant 0 : index
    %c0_0 = arith.constant 0 : index
    %c0_1 = arith.constant 0 : index
    %0 = vector.load %arg5[%c0, %c0_0, %c0_1] : memref<1x8x16xf32, #tpu.memory_space<vmem>>, vector<1x8x16xf32>
    %1 = vector.shape_cast %0 : vector<1x8x16xf32> to vector<8x16xf32>
    %c0_2 = arith.constant 0 : index
    %c0_3 = arith.constant 0 : index
    %c0_4 = arith.constant 0 : index
    %2 = vector.load %arg6[%c0_2, %c0_3, %c0_4] : memref<1x8x16xf32, #tpu.memory_space<vmem>>, vector<1x8x16xf32>
    %3 = vector.shape_cast %2 : vector<1x8x16xf32> to vector<8x16xf32>
    %c0_5 = arith.constant 0 : index
    %c0_6 = arith.constant 0 : index
    %4 = vector.load %arg9[%c0_5, %c0_6] : memref<16x16xf32, #tpu.memory_space<vmem>>, vector<16x16xf32>
    %c0_7 = arith.constant 0 : index
    %c0_8 = arith.constant 0 : index
    %c0_9 = arith.constant 0 : index
    %c0_10 = arith.constant 0 : index
    %c0_11 = arith.constant 0 : index
    %5 = vector.load %arg3[%c0_7, %c0_8, %c0_9, %c0_10, %c0_11] : memref<1x1x1x8x16xf32, #tpu.memory_space<vmem>>, vector<1x1x1x8x16xf32>
    %6 = vector.shape_cast %5 : vector<1x1x1x8x16xf32> to vector<8x16xf32>
    %c0_12 = arith.constant 0 : index
    %c0_13 = arith.constant 0 : index
    %7 = vector.load %arg7[%c0_12, %c0_13] : memref<1x16xf32, #tpu.memory_space<vmem>>, vector<1x16xf32>
    %8 = arith.mulf %6, %6 : vector<8x16xf32>
    %cst = arith.constant dense<0.000000e+00> : vector<8xf32>
    %9 = vector.multi_reduction <add>, %8, %cst [1] : vector<8x16xf32> to vector<8xf32>
    %10 = vector.shape_cast %9 : vector<8xf32> to vector<8x1xf32>
    %cst_14 = arith.constant 1.600000e+01 : f32
    %11 = vector.broadcast %cst_14 : f32 to vector<8x1xf32>
    %12 = arith.divf %10, %11 : vector<8x1xf32>
    %cst_15 = arith.constant 9.99999997E-7 : f32
    %13 = vector.broadcast %cst_15 : f32 to vector<8x1xf32>
    %14 = arith.addf %12, %13 : vector<8x1xf32>
    %15 = math.rsqrt %14 : vector<8x1xf32>
    %16 = vector.broadcast %15 : vector<8x1xf32> to vector<8x16xf32>
    %17 = arith.mulf %6, %16 : vector<8x16xf32>
    %18 = vector.broadcast %7 : vector<1x16xf32> to vector<8x16xf32>
    %19 = arith.mulf %17, %18 : vector<8x16xf32>
    %cst_16 = arith.constant dense<0.000000e+00> : vector<8x16xf32>
    %20 = tpu.matmul %19, %4, %cst_16 {dimension_numbers = #tpu.dot_dimension_numbers<[1], [0], [0], [1], [0, 0, 1, 1], [], []>} : vector<8x16xf32>, vector<16x16xf32>, vector<8x16xf32> -> vector<8x16xf32>
    %21 = arith.mulf %1, %19 : vector<8x16xf32>
    %22 = arith.mulf %3, %20 : vector<8x16xf32>
    %23 = arith.addf %21, %22 : vector<8x16xf32>
    %cst_17 = arith.constant 2.500000e-01 : f32
    %24 = vector.broadcast %cst_17 : f32 to vector<8x16xf32>
    %25 = arith.mulf %23, %24 : vector<8x16xf32>
    %c0_18 = arith.constant 0 : index
    %c0_19 = arith.constant 0 : index
    %c0_20 = arith.constant 0 : index
    %c0_21 = arith.constant 0 : index
    %26 = vector.load %arg10[%c0_18, %c0_19, %c0_20, %c0_21] : memref<1x1x8x16xf32, #tpu.memory_space<vmem>>, vector<1x1x8x16xf32>
    %27 = vector.shape_cast %26 : vector<1x1x8x16xf32> to vector<8x16xf32>
    %28 = vector.shape_cast %25 : vector<8x16xf32> to vector<1x1x8x16xf32>
    tpu.vector_store %arg10[%c0_18, %c0_19, %c0_20, %c0_21], %28 {strides = array<i32>} : memref<1x1x8x16xf32, #tpu.memory_space<vmem>>, vector<1x1x8x16xf32>,
    %c0_22 = arith.constant 0 : index
    %c0_23 = arith.constant 0 : index
    %c0_24 = arith.constant 0 : index
    %c0_25 = arith.constant 0 : index
    %c0_26 = arith.constant 0 : index
    %29 = vector.load %arg4[%c0_22, %c0_23, %c0_24, %c0_25, %c0_26] : memref<1x1x1x8x16xf32, #tpu.memory_space<vmem>>, vector<1x1x1x8x16xf32>
    %30 = vector.shape_cast %29 : vector<1x1x1x8x16xf32> to vector<8x16xf32>
    %c0_27 = arith.constant 0 : index
    %c0_28 = arith.constant 0 : index
    %31 = vector.load %arg8[%c0_27, %c0_28] : memref<1x16xf32, #tpu.memory_space<vmem>>, vector<1x16xf32>
    %32 = arith.mulf %30, %30 : vector<8x16xf32>
    %cst_29 = arith.constant dense<0.000000e+00> : vector<8xf32>
    %33 = vector.multi_reduction <add>, %32, %cst_29 [1] : vector<8x16xf32> to vector<8xf32>
    %34 = vector.shape_cast %33 : vector<8xf32> to vector<8x1xf32>
    %cst_30 = arith.constant 1.600000e+01 : f32
    %35 = vector.broadcast %cst_30 : f32 to vector<8x1xf32>
    %36 = arith.divf %34, %35 : vector<8x1xf32>
    %cst_31 = arith.constant 9.99999997E-7 : f32
    %37 = vector.broadcast %cst_31 : f32 to vector<8x1xf32>
    %38 = arith.addf %36, %37 : vector<8x1xf32>
    %39 = math.rsqrt %38 : vector<8x1xf32>
    %40 = vector.broadcast %39 : vector<8x1xf32> to vector<8x16xf32>
    %41 = arith.mulf %30, %40 : vector<8x16xf32>
    %42 = vector.broadcast %31 : vector<1x16xf32> to vector<8x16xf32>
    %43 = arith.mulf %41, %42 : vector<8x16xf32>
    %cst_32 = arith.constant dense<0.000000e+00> : vector<8x16xf32>
    %44 = tpu.matmul %43, %4, %cst_32 {dimension_numbers = #tpu.dot_dimension_numbers<[1], [0], [0], [1], [0, 0, 1, 1], [], []>} : vector<8x16xf32>, vector<16x16xf32>, vector<8x16xf32> -> vector<8x16xf32>
    %45 = arith.mulf %1, %43 : vector<8x16xf32>
    %46 = arith.mulf %3, %44 : vector<8x16xf32>
    %47 = arith.addf %45, %46 : vector<8x16xf32>
    %c0_33 = arith.constant 0 : index
    %c0_34 = arith.constant 0 : index
    %c0_35 = arith.constant 0 : index
    %c0_36 = arith.constant 0 : index
    %48 = vector.load %arg11[%c0_33, %c0_34, %c0_35, %c0_36] : memref<1x1x8x16xf32, #tpu.memory_space<vmem>>, vector<1x1x8x16xf32>
    %49 = vector.shape_cast %48 : vector<1x1x8x16xf32> to vector<8x16xf32>
    %50 = vector.shape_cast %47 : vector<8x16xf32> to vector<1x1x8x16xf32>
    tpu.vector_store %arg11[%c0_33, %c0_34, %c0_35, %c0_36], %50 {strides = array<i32>} : memref<1x1x8x16xf32, #tpu.memory_space<vmem>>, vector<1x1x8x16xf32>,
    return
  }
  func.func @transform_0(%arg0: i32, %arg1: i32, %arg2: i32) -> (i32, i32, i32, i32, i32) {
    %c0_i32 = arith.constant 0 : i32
    %c0_i32_0 = arith.constant 0 : i32
    %c0_i32_1 = arith.constant 0 : i32
    return %c0_i32, %arg1, %arg0, %arg2, %c0_i32_0 : i32, i32, i32, i32, i32
  }
  func.func @transform_1(%arg0: i32, %arg1: i32, %arg2: i32) -> (i32, i32, i32, i32, i32) {
    %c1_i32 = arith.constant 1 : i32
    %c0_i32 = arith.constant 0 : i32
    %c0_i32_0 = arith.constant 0 : i32
    return %c1_i32, %arg1, %arg0, %arg2, %c0_i32 : i32, i32, i32, i32, i32
  }
  func.func @transform_2(%arg0: i32, %arg1: i32, %arg2: i32) -> (i32, i32, i32) {
    %c0_i32 = arith.constant 0 : i32
    %c0_i32_0 = arith.constant 0 : i32
    return %arg0, %arg2, %c0_i32 : i32, i32, i32
  }
  func.func @transform_3(%arg0: i32, %arg1: i32, %arg2: i32) -> (i32, i32, i32) {
    %c0_i32 = arith.constant 0 : i32
    %c0_i32_0 = arith.constant 0 : i32
    return %arg0, %arg2, %c0_i32 : i32, i32, i32
  }
  func.func @transform_4(%arg0: i32, %arg1: i32, %arg2: i32) -> (i32, i32) {
    %c0_i32 = arith.constant 0 : i32
    %c0_i32_0 = arith.constant 0 : i32
    %c0_i32_1 = arith.constant 0 : i32
    return %c0_i32, %c0_i32_0 : i32, i32
  }
  func.func @transform_5(%arg0: i32, %arg1: i32, %arg2: i32) -> (i32, i32) {
    %c0_i32 = arith.constant 0 : i32
    %c0_i32_0 = arith.constant 0 : i32
    %c0_i32_1 = arith.constant 0 : i32
    return %c0_i32, %c0_i32_0 : i32, i32
  }
  func.func @transform_6(%arg0: i32, %arg1: i32, %arg2: i32) -> (i32, i32) {
    %c0_i32 = arith.constant 0 : i32
    %c0_i32_0 = arith.constant 0 : i32
    %c0_i32_1 = arith.constant 0 : i32
    return %c0_i32, %c0_i32_0 : i32, i32
  }
  func.func @transform_7(%arg0: i32, %arg1: i32, %arg2: i32) -> (i32, i32, i32, i32) {
    %c0_i32 = arith.constant 0 : i32
    %c0_i32_0 = arith.constant 0 : i32
    return %arg0, %arg1, %arg2, %c0_i32 : i32, i32, i32, i32
  }
  func.func @transform_8(%arg0: i32, %arg1: i32, %arg2: i32) -> (i32, i32, i32, i32) {
    %c0_i32 = arith.constant 0 : i32
    %c0_i32_0 = arith.constant 0 : i32
    return %arg0, %arg1, %arg2, %c0_i32 : i32, i32, i32, i32
  }
}

module attributes {stable_mosaic.version = 11 : i64} {
  func.func @_flash_attn_kernel(%arg0: i32, %arg1: i32, %arg2: i32, %arg3: i32, %arg4: memref<1x1x8x16xf32, #tpu.memory_space<vmem>>, %arg5: memref<1x1x8x16xf32, #tpu.memory_space<vmem>>, %arg6: memref<1x1x1x8x16xf32, #tpu.memory_space<vmem>>, %arg7: memref<1x1x8x16xf32, #tpu.memory_space<vmem>>, %arg8: memref<8x1xf32, #tpu.memory_space<vmem>>, %arg9: memref<8x1xf32, #tpu.memory_space<vmem>>, %arg10: memref<8x16xf32, #tpu.memory_space<vmem>>) attributes {dimension_semantics = [#tpu.dimension_semantics<parallel>, #tpu.dimension_semantics<parallel>, #tpu.dimension_semantics<parallel>, #tpu.dimension_semantics<arbitrary>], iteration_bounds = array<i64: 2, 2, 1, 1>, scalar_prefetch = 0 : i64, scratch_operands = 3 : i64, tpu.core_type = #tpu.core_type<tc>, window_params = [{transform_indices = @transform_0, window_bounds = array<i64: 1, 1, 8, 16>}, {transform_indices = @transform_1, window_bounds = array<i64: 1, 1, 8, 16>}, {transform_indices = @transform_2, window_bounds = array<i64: 1, 1, 1, 8, 16>}, {transform_indices = @transform_3, window_bounds = array<i64: 1, 1, 8, 16>}]} {
    %c0_i32 = arith.constant 0 : i32
    %0 = arith.cmpi eq, %arg3, %c0_i32 : i32
    %1 = arith.extui %0 : i1 to i32
    %c0_i32_0 = arith.constant 0 : i32
    %2 = arith.cmpi ne, %1, %c0_i32_0 : i32
    scf.if %2 {
      %cst_30 = arith.constant 0xFF800000 : f32
      %36 = vector.broadcast %cst_30 : f32 to vector<8x1xf32>
      %c0_31 = arith.constant 0 : index
      %c0_32 = arith.constant 0 : index
      %37 = vector.load %arg8[%c0_31, %c0_32] : memref<8x1xf32, #tpu.memory_space<vmem>>, vector<8x1xf32>
      tpu.vector_store %arg8[%c0_31, %c0_32], %36 {strides = array<i32>} : memref<8x1xf32, #tpu.memory_space<vmem>>, vector<8x1xf32>,
      %cst_33 = arith.constant 0.000000e+00 : f32
      %38 = vector.broadcast %cst_33 : f32 to vector<8x1xf32>
      %c0_34 = arith.constant 0 : index
      %c0_35 = arith.constant 0 : index
      %39 = vector.load %arg9[%c0_34, %c0_35] : memref<8x1xf32, #tpu.memory_space<vmem>>, vector<8x1xf32>
      tpu.vector_store %arg9[%c0_34, %c0_35], %38 {strides = array<i32>} : memref<8x1xf32, #tpu.memory_space<vmem>>, vector<8x1xf32>,
      %cst_36 = arith.constant 0.000000e+00 : f32
      %40 = vector.broadcast %cst_36 : f32 to vector<8x16xf32>
      %c0_37 = arith.constant 0 : index
      %c0_38 = arith.constant 0 : index
      %41 = vector.load %arg10[%c0_37, %c0_38] : memref<8x16xf32, #tpu.memory_space<vmem>>, vector<8x16xf32>
      tpu.vector_store %arg10[%c0_37, %c0_38], %40 {strides = array<i32>} : memref<8x16xf32, #tpu.memory_space<vmem>>, vector<8x16xf32>,
    } else {
    }
    %c0 = arith.constant 0 : index
    %c0_1 = arith.constant 0 : index
    %c0_2 = arith.constant 0 : index
    %c0_3 = arith.constant 0 : index
    %3 = vector.load %arg4[%c0, %c0_1, %c0_2, %c0_3] : memref<1x1x8x16xf32, #tpu.memory_space<vmem>>, vector<1x1x8x16xf32>
    %4 = vector.shape_cast %3 : vector<1x1x8x16xf32> to vector<8x16xf32>
    %c0_4 = arith.constant 0 : index
    %c0_5 = arith.constant 0 : index
    %c0_6 = arith.constant 0 : index
    %c0_7 = arith.constant 0 : index
    %5 = vector.load %arg5[%c0_4, %c0_5, %c0_6, %c0_7] : memref<1x1x8x16xf32, #tpu.memory_space<vmem>>, vector<1x1x8x16xf32>
    %6 = vector.shape_cast %5 : vector<1x1x8x16xf32> to vector<8x16xf32>
    %7 = tpu.transpose %6, [1, 0] : vector<8x16xf32> -> vector<16x8xf32>
    %cst = arith.constant dense<0.000000e+00> : vector<8x8xf32>
    %8 = tpu.matmul %4, %7, %cst {dimension_numbers = #tpu.dot_dimension_numbers<[1], [0], [0], [1], [0, 0, 1, 1], [], []>} : vector<8x16xf32>, vector<16x8xf32>, vector<8x8xf32> -> vector<8x8xf32>
    %c0_8 = arith.constant 0 : index
    %c0_9 = arith.constant 0 : index
    %9 = vector.load %arg8[%c0_8, %c0_9] : memref<8x1xf32, #tpu.memory_space<vmem>>, vector<8x1xf32>
    %cst_10 = arith.constant dense<0xFF800000> : vector<8xf32>
    %10 = vector.multi_reduction <maximumf>, %8, %cst_10 [1] : vector<8x8xf32> to vector<8xf32>
    %11 = vector.shape_cast %10 : vector<8xf32> to vector<8x1xf32>
    %12 = arith.maximumf %9, %11 : vector<8x1xf32>
    %13 = arith.subf %9, %12 : vector<8x1xf32>
    %14 = math.exp %13 : vector<8x1xf32>
    %15 = vector.broadcast %12 : vector<8x1xf32> to vector<8x8xf32>
    %16 = arith.subf %8, %15 : vector<8x8xf32>
    %17 = math.exp %16 : vector<8x8xf32>
    %c0_11 = arith.constant 0 : index
    %c0_12 = arith.constant 0 : index
    %18 = vector.load %arg9[%c0_11, %c0_12] : memref<8x1xf32, #tpu.memory_space<vmem>>, vector<8x1xf32>
    %19 = arith.mulf %14, %18 : vector<8x1xf32>
    %cst_13 = arith.constant dense<0.000000e+00> : vector<8xf32>
    %20 = vector.multi_reduction <add>, %17, %cst_13 [1] : vector<8x8xf32> to vector<8xf32>
    %21 = vector.shape_cast %20 : vector<8xf32> to vector<8x1xf32>
    %22 = arith.addf %19, %21 : vector<8x1xf32>
    %c0_14 = arith.constant 0 : index
    %c0_15 = arith.constant 0 : index
    %23 = vector.load %arg9[%c0_14, %c0_15] : memref<8x1xf32, #tpu.memory_space<vmem>>, vector<8x1xf32>
    tpu.vector_store %arg9[%c0_14, %c0_15], %22 {strides = array<i32>} : memref<8x1xf32, #tpu.memory_space<vmem>>, vector<8x1xf32>,
    %c0_16 = arith.constant 0 : index
    %c0_17 = arith.constant 0 : index
    %24 = vector.load %arg10[%c0_16, %c0_17] : memref<8x16xf32, #tpu.memory_space<vmem>>, vector<8x16xf32>
    %25 = vector.broadcast %14 : vector<8x1xf32> to vector<8x16xf32>
    %26 = arith.mulf %25, %24 : vector<8x16xf32>
    %c0_18 = arith.constant 0 : index
    %c0_19 = arith.constant 0 : index
    %c0_20 = arith.constant 0 : index
    %c0_21 = arith.constant 0 : index
    %c0_22 = arith.constant 0 : index
    %27 = vector.load %arg6[%c0_18, %c0_19, %c0_20, %c0_21, %c0_22] : memref<1x1x1x8x16xf32, #tpu.memory_space<vmem>>, vector<1x1x1x8x16xf32>
    %28 = vector.shape_cast %27 : vector<1x1x1x8x16xf32> to vector<8x16xf32>
    %cst_23 = arith.constant dense<0.000000e+00> : vector<8x16xf32>
    %29 = tpu.matmul %17, %28, %cst_23 {dimension_numbers = #tpu.dot_dimension_numbers<[1], [0], [0], [1], [0, 0, 1, 1], [], []>} : vector<8x8xf32>, vector<8x16xf32>, vector<8x16xf32> -> vector<8x16xf32>
    %30 = arith.addf %26, %29 : vector<8x16xf32>
    %c0_24 = arith.constant 0 : index
    %c0_25 = arith.constant 0 : index
    %31 = vector.load %arg10[%c0_24, %c0_25] : memref<8x16xf32, #tpu.memory_space<vmem>>, vector<8x16xf32>
    tpu.vector_store %arg10[%c0_24, %c0_25], %30 {strides = array<i32>} : memref<8x16xf32, #tpu.memory_space<vmem>>, vector<8x16xf32>,
    %c0_26 = arith.constant 0 : index
    %c0_27 = arith.constant 0 : index
    %32 = vector.load %arg8[%c0_26, %c0_27] : memref<8x1xf32, #tpu.memory_space<vmem>>, vector<8x1xf32>
    tpu.vector_store %arg8[%c0_26, %c0_27], %12 {strides = array<i32>} : memref<8x1xf32, #tpu.memory_space<vmem>>, vector<8x1xf32>,
    %c0_i32_28 = arith.constant 0 : i32
    %33 = arith.cmpi eq, %arg3, %c0_i32_28 : i32
    %34 = arith.extui %33 : i1 to i32
    %c0_i32_29 = arith.constant 0 : i32
    %35 = arith.cmpi ne, %34, %c0_i32_29 : i32
    scf.if %35 {
      %c0_30 = arith.constant 0 : index
      %c0_31 = arith.constant 0 : index
      %36 = vector.load %arg10[%c0_30, %c0_31] : memref<8x16xf32, #tpu.memory_space<vmem>>, vector<8x16xf32>
      %c0_32 = arith.constant 0 : index
      %c0_33 = arith.constant 0 : index
      %37 = vector.load %arg9[%c0_32, %c0_33] : memref<8x1xf32, #tpu.memory_space<vmem>>, vector<8x1xf32>
      %38 = vector.broadcast %37 : vector<8x1xf32> to vector<8x16xf32>
      %39 = arith.divf %36, %38 : vector<8x16xf32>
      %c0_34 = arith.constant 0 : index
      %c0_35 = arith.constant 0 : index
      %c0_36 = arith.constant 0 : index
      %c0_37 = arith.constant 0 : index
      %40 = vector.load %arg7[%c0_34, %c0_35, %c0_36, %c0_37] : memref<1x1x8x16xf32, #tpu.memory_space<vmem>>, vector<1x1x8x16xf32>
      %41 = vector.shape_cast %40 : vector<1x1x8x16xf32> to vector<8x16xf32>
      %42 = vector.shape_cast %39 : vector<8x16xf32> to vector<1x1x8x16xf32>
      tpu.vector_store %arg7[%c0_34, %c0_35, %c0_36, %c0_37], %42 {strides = array<i32>} : memref<1x1x8x16xf32, #tpu.memory_space<vmem>>, vector<1x1x8x16xf32>,
    } else {
    }
    return
  }
  func.func @transform_0(%arg0: i32, %arg1: i32, %arg2: i32, %arg3: i32) -> (i32, i32, i32, i32) {
    %c0_i32 = arith.constant 0 : i32
    %c0_i32_0 = arith.constant 0 : i32
    return %arg0, %arg1, %arg2, %c0_i32 : i32, i32, i32, i32
  }
  func.func @transform_1(%arg0: i32, %arg1: i32, %arg2: i32, %arg3: i32) -> (i32, i32, i32, i32) {
    %c0_i32 = arith.constant 0 : i32
    %c0_i32_0 = arith.constant 0 : i32
    return %arg0, %arg1, %arg3, %c0_i32 : i32, i32, i32, i32
  }
  func.func @transform_2(%arg0: i32, %arg1: i32, %arg2: i32, %arg3: i32) -> (i32, i32, i32, i32, i32) {
    %c2_i32 = arith.constant 2 : i32
    %c0_i32 = arith.constant 0 : i32
    %c0_i32_0 = arith.constant 0 : i32
    return %c2_i32, %arg1, %arg0, %arg3, %c0_i32 : i32, i32, i32, i32, i32
  }
  func.func @transform_3(%arg0: i32, %arg1: i32, %arg2: i32, %arg3: i32) -> (i32, i32, i32, i32) {
    %c0_i32 = arith.constant 0 : i32
    %c0_i32_0 = arith.constant 0 : i32
    return %arg0, %arg1, %arg2, %c0_i32 : i32, i32, i32, i32
  }
}

module attributes {stable_mosaic.version = 11 : i64} {
  func.func @_merge_proj_kernel(%arg0: i32, %arg1: i32, %arg2: i32, %arg3: i32, %arg4: memref<1x1x8x16xf32, #tpu.memory_space<vmem>>, %arg5: memref<1x16x32xf32, #tpu.memory_space<vmem>>, %arg6: memref<1x32xf32, #tpu.memory_space<vmem>>, %arg7: memref<1x8x32xf32, #tpu.memory_space<vmem>>, %arg8: memref<8x32xf32, #tpu.memory_space<vmem>>) attributes {dimension_semantics = [#tpu.dimension_semantics<parallel>, #tpu.dimension_semantics<parallel>, #tpu.dimension_semantics<parallel>, #tpu.dimension_semantics<arbitrary>], iteration_bounds = array<i64: 2, 1, 1, 2>, scalar_prefetch = 0 : i64, scratch_operands = 1 : i64, tpu.core_type = #tpu.core_type<tc>, window_params = [{transform_indices = @transform_0, window_bounds = array<i64: 1, 1, 8, 16>}, {transform_indices = @transform_1, window_bounds = array<i64: 1, 16, 32>}, {transform_indices = @transform_2, window_bounds = array<i64: 1, 32>}, {transform_indices = @transform_3, window_bounds = array<i64: 1, 8, 32>}]} {
    %c0_i32 = arith.constant 0 : i32
    %0 = arith.cmpi eq, %arg3, %c0_i32 : i32
    %1 = arith.extui %0 : i1 to i32
    %c0_i32_0 = arith.constant 0 : i32
    %2 = arith.cmpi ne, %1, %c0_i32_0 : i32
    scf.if %2 {
      %cst_12 = arith.constant 0.000000e+00 : f32
      %14 = vector.broadcast %cst_12 : f32 to vector<8x32xf32>
      %c0_13 = arith.constant 0 : index
      %c0_14 = arith.constant 0 : index
      %15 = vector.load %arg8[%c0_13, %c0_14] : memref<8x32xf32, #tpu.memory_space<vmem>>, vector<8x32xf32>
      tpu.vector_store %arg8[%c0_13, %c0_14], %14 {strides = array<i32>} : memref<8x32xf32, #tpu.memory_space<vmem>>, vector<8x32xf32>,
    } else {
    }
    %c0 = arith.constant 0 : index
    %c0_1 = arith.constant 0 : index
    %3 = vector.load %arg8[%c0, %c0_1] : memref<8x32xf32, #tpu.memory_space<vmem>>, vector<8x32xf32>
    %c0_2 = arith.constant 0 : index
    %c0_3 = arith.constant 0 : index
    %c0_4 = arith.constant 0 : index
    %c0_5 = arith.constant 0 : index
    %4 = vector.load %arg4[%c0_2, %c0_3, %c0_4, %c0_5] : memref<1x1x8x16xf32, #tpu.memory_space<vmem>>, vector<1x1x8x16xf32>
    %5 = vector.shape_cast %4 : vector<1x1x8x16xf32> to vector<8x16xf32>
    %c0_6 = arith.constant 0 : index
    %c0_7 = arith.constant 0 : index
    %c0_8 = arith.constant 0 : index
    %6 = vector.load %arg5[%c0_6, %c0_7, %c0_8] : memref<1x16x32xf32, #tpu.memory_space<vmem>>, vector<1x16x32xf32>
    %7 = vector.shape_cast %6 : vector<1x16x32xf32> to vector<16x32xf32>
    %cst = arith.constant dense<0.000000e+00> : vector<8x32xf32>
    %8 = tpu.matmul %5, %7, %cst {dimension_numbers = #tpu.dot_dimension_numbers<[1], [0], [0], [1], [0, 0, 1, 1], [], []>} : vector<8x16xf32>, vector<16x32xf32>, vector<8x32xf32> -> vector<8x32xf32>
    %9 = arith.addf %3, %8 : vector<8x32xf32>
    %c0_9 = arith.constant 0 : index
    %c0_10 = arith.constant 0 : index
    %10 = vector.load %arg8[%c0_9, %c0_10] : memref<8x32xf32, #tpu.memory_space<vmem>>, vector<8x32xf32>
    tpu.vector_store %arg8[%c0_9, %c0_10], %9 {strides = array<i32>} : memref<8x32xf32, #tpu.memory_space<vmem>>, vector<8x32xf32>,
    %c1_i32 = arith.constant 1 : i32
    %11 = arith.cmpi eq, %arg3, %c1_i32 : i32
    %12 = arith.extui %11 : i1 to i32
    %c0_i32_11 = arith.constant 0 : i32
    %13 = arith.cmpi ne, %12, %c0_i32_11 : i32
    scf.if %13 {
      %c0_12 = arith.constant 0 : index
      %c0_13 = arith.constant 0 : index
      %14 = vector.load %arg8[%c0_12, %c0_13] : memref<8x32xf32, #tpu.memory_space<vmem>>, vector<8x32xf32>
      %c0_14 = arith.constant 0 : index
      %c0_15 = arith.constant 0 : index
      %15 = vector.load %arg6[%c0_14, %c0_15] : memref<1x32xf32, #tpu.memory_space<vmem>>, vector<1x32xf32>
      %16 = vector.broadcast %15 : vector<1x32xf32> to vector<8x32xf32>
      %17 = arith.addf %14, %16 : vector<8x32xf32>
      %c0_16 = arith.constant 0 : index
      %c0_17 = arith.constant 0 : index
      %c0_18 = arith.constant 0 : index
      %18 = vector.load %arg7[%c0_16, %c0_17, %c0_18] : memref<1x8x32xf32, #tpu.memory_space<vmem>>, vector<1x8x32xf32>
      %19 = vector.shape_cast %18 : vector<1x8x32xf32> to vector<8x32xf32>
      %20 = vector.shape_cast %17 : vector<8x32xf32> to vector<1x8x32xf32>
      tpu.vector_store %arg7[%c0_16, %c0_17, %c0_18], %20 {strides = array<i32>} : memref<1x8x32xf32, #tpu.memory_space<vmem>>, vector<1x8x32xf32>,
    } else {
    }
    return
  }
  func.func @transform_0(%arg0: i32, %arg1: i32, %arg2: i32, %arg3: i32) -> (i32, i32, i32, i32) {
    %c0_i32 = arith.constant 0 : i32
    %c0_i32_0 = arith.constant 0 : i32
    return %arg0, %arg3, %arg1, %c0_i32 : i32, i32, i32, i32
  }
  func.func @transform_1(%arg0: i32, %arg1: i32, %arg2: i32, %arg3: i32) -> (i32, i32, i32) {
    %c0_i32 = arith.constant 0 : i32
    %c0_i32_0 = arith.constant 0 : i32
    return %arg3, %c0_i32, %arg2 : i32, i32, i32
  }
  func.func @transform_2(%arg0: i32, %arg1: i32, %arg2: i32, %arg3: i32) -> (i32, i32) {
    %c0_i32 = arith.constant 0 : i32
    %c0_i32_0 = arith.constant 0 : i32
    return %c0_i32, %arg2 : i32, i32
  }
  func.func @transform_3(%arg0: i32, %arg1: i32, %arg2: i32, %arg3: i32) -> (i32, i32, i32) {
    %c0_i32 = arith.constant 0 : i32
    return %arg0, %arg1, %arg2 : i32, i32, i32
  }
}

</mosaic_0001>

<llo_original>
// kernel: self_attention_forward.4
$region0: #{self_attention_forward.4}
  #allocation0 [shape = 'u32[]', space=smem, size = 0x4, offset = 0x4, fixed_abs, tag = 'smem constant byte address 0x4 - core index']
  #allocation1 [shape = 'u32[144,128]{1,0:T(1,128)}', space=vmem, size = 0x12000, scoped, tag = 'internal scratch']
  #allocation2 [shape = 'f32[8,16]{1,0:T(8,128)}', space=vmem, size = 0x1000, scoped, tag = 'scratch operand']
  %s0 = inlined_call_operand.vmem [shape: f32[16,32], index: 0, kind: input, shape index: {}]
  %s1 = inlined_call_operand.vmem [shape: f32[6,32,16], index: 1, kind: input, shape index: {}]
  %s2 = inlined_call_operand.vmem [shape: f32[6,1,16], index: 2, kind: input, shape index: {}]
  %s3 = inlined_call_operand.vmem [shape: f32[6,16,16], index: 3, kind: output, shape index: {}]
  %s4 = sld [smem:[#allocation0]]
  $region53: #{self_attention_forward.4} parent=0
    _
  %s6 = ssub.s32 1, %s4
  %s7 = scalar_select 0, %s6, %s4
  loop: start=0, step=1, limit=14
  $region2: #{self_attention_forward.4} parent=0 // loop_pre_header
    _
  $region3: #{self_attention_forward.4} parent=0 // loop_header
    %s9 = sphi 0, %s13
    %p10 = scmp.ge.s32.totalorder %s9, 14
    %s16 = sphi 0, %s35
    %s17 = sphi 0, %s31
    %s18 = sphi 0, %s27
    %s19 = sphi 0, %s16
    %s20 = sphi 0, %s17
    %s21 = sphi 0, %s18
    %s22 = sphi 0, %s19
    %s23 = sphi 0, %s20
    %s24 = sphi 0, %s21
    %s40 = sphi 0, %s42
    %s43 = sphi 0, %s40
    %s44 = sphi 0, %s43
    %s60 = sphi 0, %s44
    %s68 = sphi 0, %s70
    %s71 = sphi 0, %s68
    %s72 = sphi 0, %s71
    %s88 = sphi 0, %s72
    %s94 = sphi 0, %s96
    %s97 = sphi 0, %s94
    %s98 = sphi 0, %s97
    %s114 = sphi 0, %s98
    %s122 = sphi 0, %s124
    %s125 = sphi 0, %s122
    %s126 = sphi 0, %s125
    %s142 = sphi 0, %s126
  $region4: #{self_attention_forward.4} parent=0 // loop_header_branch
    %12 = sbr.rel (%p10) target = $region8
  $region5: #{self_attention_forward.4} parent=0 // loop_body
    %s14 = ssub.s32 %s9, 1
    %s15 = ssub.s32 %s9, 2
    %s25 = sadd.s32 1, %s18
    %p26 = scmp.ge.s32.totalorder %s25, 1
    %s27 = scalar_select %p26, 0, %s25
    %s28 = sadd.s32 1, %s17
    %s29 = scalar_select %p26, %s28, %s17
    %p30 = scmp.ge.s32.totalorder %s29, 2
    %s31 = scalar_select %p30, 0, %s29
    %s32 = sadd.s32 1, %s16
    %s33 = scalar_select %p30, %s32, %s16
    %p34 = scmp.ge.s32.totalorder %s33, 6
    %s35 = scalar_select %p34, 0, %s33
    %s36 = ssub.s32 %s17, %s31
    %s37 = ssub.s32 %s18, %s27
    %s38 = sor.u32 %s36, %s37
    %p39 = scmp.eq.s32.totalorder %s38, 0
    %s41 = sadd.s32 %s40, 1
    %s42 = scalar_select %p39, %s40, %s41
    %p45 = pneg %p39
    %p46 = scmp.eq.s32.totalorder %s9, 11
    %p47 = por %p45, %p46
    %p48 = scmp.ne.s32.totalorder %s40, %s43
    %p49 = scmp.eq.s32.totalorder %s9, 0
    %p50 = por %p48, %p49
    %p51 = scmp.ne.s32.totalorder %s40, %s43
    %p52 = scmp.eq.s32.totalorder %s14, 11
    %p53 = por %p51, %p52
    %p54 = scmp.ne.s32.totalorder %s43, %s44
    %p55 = scmp.eq.s32.totalorder %s14, 0
    %p56 = por %p54, %p55
    %p57 = scmp.ne.s32.totalorder %s43, %s44
    %p58 = scmp.eq.s32.totalorder %s15, 11
    %p59 = por %p57, %p58
    %p61 = scmp.ne.s32.totalorder %s44, %s60
    %p62 = scmp.eq.s32.totalorder %s15, 0
    %p63 = por %p61, %p62
    %s64 = ssub.s32 %s16, %s35
    %s65 = ssub.s32 %s18, %s27
    %s66 = sor.u32 %s64, %s65
    %p67 = scmp.eq.s32.totalorder %s66, 0
    %s69 = sadd.s32 %s68, 1
    %s70 = scalar_select %p67, %s68, %s69
    %p73 = pneg %p67
    %p74 = scmp.eq.s32.totalorder %s9, 11
    %p75 = por %p73, %p74
    %p76 = scmp.ne.s32.totalorder %s68, %s71
    %p77 = scmp.eq.s32.totalorder %s9, 0
    %p78 = por %p76, %p77
    %p79 = scmp.ne.s32.totalorder %s68, %s71
    %p80 = scmp.eq.s32.totalorder %s14, 11
    %p81 = por %p79, %p80
    %p82 = scmp.ne.s32.totalorder %s71, %s72
    %p83 = scmp.eq.s32.totalorder %s14, 0
    %p84 = por %p82, %p83
    %p85 = scmp.ne.s32.totalorder %s71, %s72
    %p86 = scmp.eq.s32.totalorder %s15, 11
    %p87 = por %p85, %p86
    %p89 = scmp.ne.s32.totalorder %s72, %s88
    %p90 = scmp.eq.s32.totalorder %s15, 0
    %p91 = por %p89, %p90
    %s92 = ssub.s32 %s16, %s35
    %p93 = scmp.eq.s32.totalorder %s92, 0
    %s95 = sadd.s32 %s94, 1
    %s96 = scalar_select %p93, %s94, %s95
    %p99 = pneg %p93
    %p100 = scmp.eq.s32.totalorder %s9, 11
    %p101 = por %p99, %p100
    %p102 = scmp.ne.s32.totalorder %s94, %s97
    %p103 = scmp.eq.s32.totalorder %s9, 0
    %p104 = por %p102, %p103
    %p105 = scmp.ne.s32.totalorder %s94, %s97
    %p106 = scmp.eq.s32.totalorder %s14, 11
    %p107 = por %p105, %p106
    %p108 = scmp.ne.s32.totalorder %s97, %s98
    %p109 = scmp.eq.s32.totalorder %s14, 0
    %p110 = por %p108, %p109
    %p111 = scmp.ne.s32.totalorder %s97, %s98
    %p112 = scmp.eq.s32.totalorder %s15, 11
    %p113 = por %p111, %p112
    %p115 = scmp.ne.s32.totalorder %s98, %s114
    %p116 = scmp.eq.s32.totalorder %s15, 0
    %p117 = por %p115, %p116
    %s118 = ssub.s32 %s16, %s35
    %s119 = ssub.s32 %s17, %s31
    %s120 = sor.u32 %s118, %s119
    %p121 = scmp.eq.s32.totalorder %s120, 0
    %s123 = sadd.s32 %s122, 1
    %s124 = scalar_select %p121, %s122, %s123
    %p127 = pneg %p121
    %p128 = scmp.eq.s32.totalorder %s9, 11
    %p129 = por %p127, %p128
    %p130 = scmp.ne.s32.totalorder %s122, %s125
    %p131 = scmp.eq.s32.totalorder %s9, 0
    %p132 = por %p130, %p131
    %p133 = scmp.ne.s32.totalorder %s122, %s125
    %p134 = scmp.eq.s32.totalorder %s14, 11
    %p135 = por %p133, %p134
    %p136 = scmp.ne.s32.totalorder %s125, %s126
    %p137 = scmp.eq.s32.totalorder %s14, 0
    %p138 = por %p136, %p137
    %p139 = scmp.ne.s32.totalorder %s125, %s126
    %p140 = scmp.eq.s32.totalorder %s15, 11
    %p141 = por %p139, %p140
    %p143 = scmp.ne.s32.totalorder %s126, %s142
    %p144 = scmp.eq.s32.totalorder %s15, 0
    %p145 = por %p143, %p144
    %p146 = scmp.le.s32.totalorder 1, %s9
    %p147 = scmp.lt.s32.totalorder %s9, 13
    %p148 = pnand %p146, %p147
    %p149 = pneg %p148
    // Predicated region
    $region9: #{self_attention_forward.4} parent=5 // pred_check
      _
    $region10: #{self_attention_forward.4} parent=5 // pred_check_branch
      %151 = sbr.rel (%p148) target = $region12
    $region11: #{self_attention_forward.4} parent=5 // pred_region
      %s152 = ssub.s32 %s9, 1
    $region12: #{self_attention_forward.4} parent=5 // pred_fallthru
      _
    %p153 = scmp.lt.s32.totalorder %s9, 12
    // Predicated region
    $region13: #{self_attention_forward.4} parent=5 // pred_check
      %p154 = pneg %p153
    $region14: #{self_attention_forward.4} parent=5 // pred_check_branch
      %156 = sbr.rel (%p154) target = $region16
    $region15: #{self_attention_forward.4} parent=5 // pred_region
      // Predicated region
      $region17: #{self_attention_forward.4} parent=15 // pred_check
        %p157 = pneg %p50
      $region18: #{self_attention_forward.4} parent=15 // pred_check_branch
        %159 = sbr.rel (%p157) target = $region20
      $region19: #{self_attention_forward.4} parent=15 // pred_region
        %p160 = scmp.lt.s32.totalorder %s17, 1
        %s161 = scalar_select %p160, %s17, 1
        %p162 = scmp.lt.s32.totalorder %s18, 0
        %s163 = scalar_select %p162, %s18, 0
        %s164 = sadd.s32 %s163, %s161
        %s165 = smul.addr %s164, 8
        %s166 = scalar_lea.vmem %s0, %s165
      $region20: #{self_attention_forward.4} parent=15 // pred_fallthru
        _
      // Predicated region
      $region21: #{self_attention_forward.4} parent=15 // pred_check
        %p167 = pneg %p78
      $region22: #{self_attention_forward.4} parent=15 // pred_check_branch
        %169 = sbr.rel (%p167) target = $region24
      $region23: #{self_attention_forward.4} parent=15 // pred_region
        %s170 = smul.u32 4, %s18
        %p171 = scmp.lt.s32.totalorder %s16, 5
        %s172 = scalar_select %p171, %s16, 5
        %p173 = scmp.lt.s32.totalorder %s170, 3
        %s174 = scalar_select %p173, %s170, 3
        %s175 = smul.addr %s172, 4
        %s176 = sadd.s32 %s174, %s175
        %s177 = smul.addr %s176, 8
        %s178 = scalar_lea.vmem %s1, %s177
        %s179 = smul.u32 4, %s18
      $region24: #{self_attention_forward.4} parent=15 // pred_fallthru
        _
      // Predicated region
      $region25: #{self_attention_forward.4} parent=15 // pred_check
        %p180 = pneg %p104
      $region26: #{self_attention_forward.4} parent=15 // pred_check_branch
        %182 = sbr.rel (%p180) target = $region28
      $region27: #{self_attention_forward.4} parent=15 // pred_region
        %p183 = scmp.lt.s32.totalorder %s16, 5
        %s184 = scalar_select %p183, %s16, 5
        %s185 = scalar_lea.vmem %s2, %s184
      $region28: #{self_attention_forward.4} parent=15 // pred_fallthru
        _
    $region16: #{self_attention_forward.4} parent=5 // pred_fallthru
      _
    %p186 = scmp.le.s32.totalorder 1, %s9
    %p187 = scmp.lt.s32.totalorder %s9, 13
    %p188 = pnand %p186, %p187
    %p189 = pneg %p188
    // Predicated region
    $region29: #{self_attention_forward.4} parent=5 // pred_check
      _
    $region30: #{self_attention_forward.4} parent=5 // pred_check_branch
      %191 = sbr.rel (%p188) target = $region32
    $region31: #{self_attention_forward.4} parent=5 // pred_region
      %s192 = ssub.s32 %s9, 1
      %p193 = scmp.lt.s32.totalorder %s20, 1
      %s194 = scalar_select %p193, %s20, 1
      %p195 = scmp.lt.s32.totalorder %s21, 0
      %s196 = scalar_select %p195, %s21, 0
      %s197 = sadd.s32 %s196, %s194
      %s198 = smul.addr %s197, 8
      %s199 = scalar_lea.vmem %s0, %s198
      %p200 = pneg %p56
      %p201 = pneg %p53
      %s202 = smul.u32 4, %s21
      %p203 = scmp.lt.s32.totalorder %s19, 5
      %s204 = scalar_select %p203, %s19, 5
      %p205 = scmp.lt.s32.totalorder %s202, 3
      %s206 = scalar_select %p205, %s202, 3
      %s207 = smul.addr %s204, 4
      %s208 = sadd.s32 %s206, %s207
      %s209 = smul.addr %s208, 8
      %s210 = scalar_lea.vmem %s1, %s209
      %p211 = pneg %p84
      %p212 = pneg %p81
      %p213 = scmp.lt.s32.totalorder %s19, 5
      %s214 = scalar_select %p213, %s19, 5
      %s215 = scalar_lea.vmem %s2, %s214
      %p216 = pneg %p110
      %p217 = pneg %p107
      %p218 = pneg %p138
      %p219 = pneg %p135
      %p220 = scmp.lt.s32.totalorder %s19, 5
      %s221 = scalar_select %p220, %s19, 5
      %p222 = scmp.lt.s32.totalorder %s20, 1
      %s223 = scalar_select %p222, %s20, 1
      %s224 = smul.addr %s221, 2
      %s225 = sadd.s32 %s223, %s224
      %s226 = smul.addr %s225, 8
      %s227 = scalar_lea.vmem %s3, %s226
      %p228 = scmp.lt.s32.totalorder %s20, 1
      %s229 = scalar_select %p228, %s20, 1
      %p230 = scmp.lt.s32.totalorder %s21, 0
      %s231 = scalar_select %p230, %s21, 0
      %s232 = sadd.s32 %s231, %s229
      %s233 = smul.addr %s232, 8
      %s234 = scalar_lea.vmem %s0, %s233
      %s235 = smul.u32 4, %s21
      %p236 = scmp.lt.s32.totalorder %s19, 5
      %s237 = scalar_select %p236, %s19, 5
      %p238 = scmp.lt.s32.totalorder %s235, 3
      %s239 = scalar_select %p238, %s235, 3
      %s240 = smul.addr %s237, 4
      %s241 = sadd.s32 %s239, %s240
      %s242 = smul.addr %s241, 8
      %s243 = scalar_lea.vmem %s1, %s242
      %s244 = smul.u32 4, %s21
      %p245 = scmp.lt.s32.totalorder %s19, 5
      %s246 = scalar_select %p245, %s19, 5
      %s247 = scalar_lea.vmem %s2, %s246
      %p248 = scmp.lt.s32.totalorder %s19, 5
      %s249 = scalar_select %p248, %s19, 5
      %p250 = scmp.lt.s32.totalorder %s20, 1
      %s251 = scalar_select %p250, %s20, 1
      %s252 = smul.addr %s249, 2
      %s253 = sadd.s32 %s251, %s252
      %s254 = smul.addr %s253, 8
      %s255 = scalar_lea.vmem %s3, %s254
      %p256 = scmp.eq.s32.totalorder %s21, 0
      // Predicated region
      $region33: #{self_attention_forward.4} parent=31 // pred_check
        %p257 = pneg %p256
      $region34: #{self_attention_forward.4} parent=31 // pred_check_branch
        %259 = sbr.rel (%p257) target = $region36
      $region35: #{self_attention_forward.4} parent=31 // pred_region
        %vm260 = vcmask 130048
        %261 = vst.msk [vmem:[#allocation2] sm:$0xff] %vm260, 0.0
      $region36: #{self_attention_forward.4} parent=31 // pred_fallthru
        _
      %v262 = vld [vmem:[#allocation2] sm:$0xff]
      %v263 = vld [vmem:[%s234] sm:$0xff]
      %v264 = vld [vmem:[%s243] sm:$0xff]
      %v265 = vld [vmem:[%s243 + $0x8] sm:$0xff]
      %v266 = vld [vmem:[%s243 + $0x10] sm:$0xff]
      %v267 = vld [vmem:[%s243 + $0x18] sm:$0xff]
      %vm268 = vcmask 261120
      %v270 = vsel %vm268, %v263, 0
      %272 = vmatprep.subr.mxu0 0.0
      %273 = vmatpush1.msra.mxu0 %v264
      %274 = vmatprep.subr.mxu0 0.0
      %275 = vmatpush1.msra.mxu0 %v265
      %276 = vmatprep.subr.mxu0 0.0
      %277 = vmatpush1.msra.mxu0 %v266
      %278 = vmatprep.subr.mxu0 0.0
      %279 = vmatpush1.msra.mxu0 %v267
      %280 = vmatprep.subr.mxu0 0.0
      %281 = vmatpush1.msra.mxu0 0.0
      %282 = vmatprep.subr.mxu0 0.0
      %283 = vmatpush1.msra.mxu0 0.0
      %284 = vmatprep.subr.mxu0 0.0
      %285 = vmatpush1.msra.mxu0 0.0
      %286 = vmatprep.subr.mxu0 0.0
      %287 = vmatpush1.msra.mxu0 0.0
      %288 = vmatprep.subr.mxu0 0.0
      %289 = vmatpush1.msra.mxu0 0.0
      %290 = vmatprep.subr.mxu0 0.0
      %291 = vmatpush1.msra.mxu0 0.0
      %292 = vmatprep.subr.mxu0 0.0
      %293 = vmatpush1.msra.mxu0 0.0
      %294 = vmatprep.subr.mxu0 0.0
      %295 = vmatpush1.msra.mxu0 0.0
      %296 = vmatprep.subr.mxu0 0.0
      %297 = vmatpush1.msra.mxu0 0.0
      %298 = vmatprep.subr.mxu0 0.0
      %299 = vmatpush1.msra.mxu0 0.0
      %300 = vmatprep.subr.mxu0 0.0
      %301 = vmatpush1.msra.mxu0 0.0
      %302 = vmatprep.subr.mxu0 0.0
      %303 = vmatpush1.msra.mxu0 0.0
      %304 = vmatprep.subr.mxu0 0.0
      %305 = vmatpush1.msra.mxu0 0.0
      %306 = vmatprep.subr.mxu0 0.0
      %307 = vmatpush1.msra.mxu0 0.0
      %308 = vmatprep.subr.mxu0 0.0
      %309 = vmatpush1.msra.mxu0 0.0
      %310 = vmatprep.subr.mxu0 0.0
      %311 = vmatpush1.msra.mxu0 0.0
      %312 = vmatprep.subr.mxu0 0.0
      %313 = vmatpush1.msra.mxu0 0.0
      %314 = vmatprep.subr.mxu0 0.0
      %315 = vmatpush1.msra.mxu0 0.0
      %316 = vmatprep.subr.mxu0 0.0
      %317 = vmatpush1.msra.mxu0 0.0
      %318 = vmatprep.subr.mxu0 0.0
      %319 = vmatpush1.msra.mxu0 0.0
      %320 = vmatprep.subr.mxu0 0.0
      %321 = vmatpush1.msra.mxu0 0.0
      %322 = vmatprep.subr.mxu0 0.0
      %323 = vmatpush1.msra.mxu0 0.0
      %324 = vmatprep.subr.mxu0 0.0
      %325 = vmatpush1.msra.mxu0 0.0
      %326 = vmatprep.subr.mxu0 0.0
      %327 = vmatpush1.msra.mxu0 0.0
      %328 = vmatprep.subr.mxu0 0.0
      %329 = vmatpush1.msra.mxu0 0.0
      %330 = vmatprep.subr.mxu0 0.0
      %331 = vmatpush1.msra.mxu0 0.0
      %332 = vmatprep.subr.mxu0 0.0
      %333 = vmatpush1.msra.mxu0 0.0
      %334 = vmatprep.subr.mxu0 0.0
      %335 = vmatpush1.msra.mxu0 0.0
      %336 = vmatprep.mubr.f32.mxu0 0.0
      %337 = vmatmul.mubr.f32.gmra.mrb[0].mxu0 %v270
      %v338 = vpop.f32.mrb[0].mxu0
      %v339 = vadd.f32 0.0, %v338
      %v340 = vpop.f32.mrb[0].mxu0
      %341 = vdwg.mxu0
      %v342 = vadd.f32 %v262, %v339
      %vm343 = vcmask 130048
      %344 = vst.msk [vmem:[#allocation2] sm:$0xff] %vm343, %v342
      // Predicated region
      $region37: #{self_attention_forward.4} parent=31 // pred_check
        %p345 = pneg %p256
      $region38: #{self_attention_forward.4} parent=31 // pred_check_branch
        %347 = sbr.rel (%p345) target = $region40
      $region39: #{self_attention_forward.4} parent=31 // pred_region
        %v348 = vld [vmem:[#allocation2] sm:$0xff]
        %v349 = vld [vmem:[%s247] sm:$0x1]
        %v351 = vlaneseq
        %v352 = vshrl.u32 %v351, 7
        %v353 = vsub.s32 0, %v352
        %v354 = vrot.slane %v349, %v353
        %v356 = vadd.f32 %v348, %v354
        %357 = vst.msk [vmem:[%s255] sm:$0xff] %vm343, %v356
      $region40: #{self_attention_forward.4} parent=31 // pred_fallthru
        _
      %p358 = scmp.lt.s32.totalorder %s19, 5
      %s359 = scalar_select %p358, %s19, 5
      %p360 = scmp.lt.s32.totalorder %s20, 1
      %s361 = scalar_select %p360, %s20, 1
      %s362 = smul.addr %s359, 2
      %s363 = sadd.s32 %s361, %s362
      %s364 = smul.addr %s363, 8
      %s365 = scalar_lea.vmem %s3, %s364
      // Predicated region
      $region41: #{self_attention_forward.4} parent=31 // pred_check
        %p366 = pneg %p135
      $region42: #{self_attention_forward.4} parent=31 // pred_check_branch
        %368 = sbr.rel (%p366) target = $region44
      $region43: #{self_attention_forward.4} parent=31 // pred_region
        _
      $region44: #{self_attention_forward.4} parent=31 // pred_fallthru
        _
    $region32: #{self_attention_forward.4} parent=5 // pred_fallthru
      _
    %p369 = scmp.le.s32.totalorder 2, %s9
    // Predicated region
    $region45: #{self_attention_forward.4} parent=5 // pred_check
      %p370 = pneg %p369
    $region46: #{self_attention_forward.4} parent=5 // pred_check_branch
      %372 = sbr.rel (%p370) target = $region48
    $region47: #{self_attention_forward.4} parent=5 // pred_region
      %s373 = ssub.s32 %s9, 2
      // Predicated region
      $region49: #{self_attention_forward.4} parent=47 // pred_check
        %p374 = pneg %p141
      $region50: #{self_attention_forward.4} parent=47 // pred_check_branch
        %376 = sbr.rel (%p374) target = $region52
      $region51: #{self_attention_forward.4} parent=47 // pred_region
        %p377 = scmp.lt.s32.totalorder %s22, 5
        %s378 = scalar_select %p377, %s22, 5
        %p379 = scmp.lt.s32.totalorder %s23, 1
        %s380 = scalar_select %p379, %s23, 1
        %s381 = smul.addr %s378, 2
        %s382 = sadd.s32 %s380, %s381
        %s383 = smul.addr %s382, 8
        %s384 = scalar_lea.vmem %s3, %s383
      $region52: #{self_attention_forward.4} parent=47 // pred_fallthru
        _
    $region48: #{self_attention_forward.4} parent=5 // pred_fallthru
      _
  $region6: #{self_attention_forward.4} parent=0 // loop_footer
    %s13 = sadd.s32 1, %s9
  $region7: #{self_attention_forward.4} parent=0 // loop_footer_branch
    %8 = sbr.rel target = $region3
  $region8: #{self_attention_forward.4} parent=0 // loop_exit
    _

// kernel: self_attention_forward.5
$region0: #{self_attention_forward.5}
  #allocation0 [shape = 'u32[]', space=smem, size = 0x4, offset = 0x4, fixed_abs, tag = 'smem constant byte address 0x4 - core index']
  #allocation1 [shape = 'u32[144,128]{1,0:T(1,128)}', space=vmem, size = 0x12000, scoped, tag = 'internal scratch']
  %s0 = inlined_call_operand.vmem [shape: f32[3,2,2,8,16], index: 0, kind: input, shape index: {}, may-alias: {0,1}]
  %s1 = inlined_call_operand.vmem [shape: f32[3,2,2,8,16], index: 1, kind: input, shape index: {}, may-alias: {0,1}]
  %s2 = inlined_call_operand.vmem [shape: f32[2,8,16], index: 2, kind: input, shape index: {}]
  %s3 = inlined_call_operand.vmem [shape: f32[2,8,16], index: 3, kind: input, shape index: {}]
  %s4 = inlined_call_operand.vmem [shape: f32[1,16], index: 4, kind: input, shape index: {}]
  %s5 = inlined_call_operand.vmem [shape: f32[1,16], index: 5, kind: input, shape index: {}]
  %s6 = inlined_call_operand.vmem [shape: f32[16,16], index: 6, kind: input, shape index: {}]
  %s7 = inlined_call_operand.vmem [shape: f32[2,2,8,16], index: 7, kind: output, shape index: {0}]
  %s8 = inlined_call_operand.vmem [shape: f32[2,2,8,16], index: 8, kind: output, shape index: {1}]
  %9 = xla_tuple %s7, %s8
  %s10 = sld [smem:[#allocation0]]
  $region69: #{self_attention_forward.5} parent=0
    _
  %s12 = ssub.s32 1, %s10
  %s13 = scalar_select 0, %s12, %s10
  loop: start=0, step=1, limit=6
  $region2: #{self_attention_forward.5} parent=0 // loop_pre_header
    _
  $region3: #{self_attention_forward.5} parent=0 // loop_header
    %s15 = sphi 0, %s19
    %p16 = scmp.ge.s32.totalorder %s15, 6
    %s22 = sphi 0, %s41
    %s23 = sphi 0, %s37
    %s24 = sphi 0, %s33
    %s25 = sphi 0, %s22
    %s26 = sphi 0, %s23
    %s27 = sphi 0, %s24
    %s28 = sphi 0, %s25
    %s29 = sphi 0, %s26
    %s30 = sphi 0, %s27
    %s48 = sphi 0, %s50
    %s51 = sphi 0, %s48
    %s52 = sphi 0, %s51
    %s68 = sphi 0, %s52
    %s78 = sphi 0, %s80
    %s81 = sphi 0, %s78
    %s82 = sphi 0, %s81
    %s98 = sphi 0, %s82
    %s106 = sphi 0, %s108
    %s109 = sphi 0, %s106
    %s110 = sphi 0, %s109
    %s126 = sphi 0, %s110
    %s134 = sphi 0, %s136
    %s137 = sphi 0, %s134
    %s138 = sphi 0, %s137
    %s154 = sphi 0, %s138
    %s158 = sphi 0, %s158
    %s160 = sphi 0, %s158
    %s161 = sphi 0, %s160
    %s175 = sphi 0, %s161
    %s179 = sphi 0, %s179
    %s181 = sphi 0, %s179
    %s182 = sphi 0, %s181
    %s196 = sphi 0, %s182
    %s200 = sphi 0, %s200
    %s202 = sphi 0, %s200
    %s203 = sphi 0, %s202
    %s217 = sphi 0, %s203
    %s227 = sphi 0, %s229
    %s230 = sphi 0, %s227
    %s231 = sphi 0, %s230
    %s247 = sphi 0, %s231
    %s257 = sphi 0, %s259
    %s260 = sphi 0, %s257
    %s261 = sphi 0, %s260
    %s277 = sphi 0, %s261
  $region4: #{self_attention_forward.5} parent=0 // loop_header_branch
    %18 = sbr.rel (%p16) target = $region8
  $region5: #{self_attention_forward.5} parent=0 // loop_body
    %s20 = ssub.s32 %s15, 1
    %s21 = ssub.s32 %s15, 2
    %s31 = sadd.s32 1, %s24
    %p32 = scmp.ge.s32.totalorder %s31, 1
    %s33 = scalar_select %p32, 0, %s31
    %s34 = sadd.s32 1, %s23
    %s35 = scalar_select %p32, %s34, %s23
    %p36 = scmp.ge.s32.totalorder %s35, 2
    %s37 = scalar_select %p36, 0, %s35
    %s38 = sadd.s32 1, %s22
    %s39 = scalar_select %p36, %s38, %s22
    %p40 = scmp.ge.s32.totalorder %s39, 2
    %s41 = scalar_select %p40, 0, %s39
    %s42 = ssub.s32 %s23, %s37
    %s43 = ssub.s32 %s22, %s41
    %s44 = sor.u32 %s42, %s43
    %s45 = ssub.s32 %s24, %s33
    %s46 = sor.u32 %s44, %s45
    %p47 = scmp.eq.s32.totalorder %s46, 0
    %s49 = sadd.s32 %s48, 1
    %s50 = scalar_select %p47, %s48, %s49
    %p53 = pneg %p47
    %p54 = scmp.eq.s32.totalorder %s15, 3
    %p55 = por %p53, %p54
    %p56 = scmp.ne.s32.totalorder %s48, %s51
    %p57 = scmp.eq.s32.totalorder %s15, 0
    %p58 = por %p56, %p57
    %p59 = scmp.ne.s32.totalorder %s48, %s51
    %p60 = scmp.eq.s32.totalorder %s20, 3
    %p61 = por %p59, %p60
    %p62 = scmp.ne.s32.totalorder %s51, %s52
    %p63 = scmp.eq.s32.totalorder %s20, 0
    %p64 = por %p62, %p63
    %p65 = scmp.ne.s32.totalorder %s51, %s52
    %p66 = scmp.eq.s32.totalorder %s21, 3
    %p67 = por %p65, %p66
    %p69 = scmp.ne.s32.totalorder %s52, %s68
    %p70 = scmp.eq.s32.totalorder %s21, 0
    %p71 = por %p69, %p70
    %s72 = ssub.s32 %s23, %s37
    %s73 = ssub.s32 %s22, %s41
    %s74 = sor.u32 %s72, %s73
    %s75 = ssub.s32 %s24, %s33
    %s76 = sor.u32 %s74, %s75
    %p77 = scmp.eq.s32.totalorder %s76, 0
    %s79 = sadd.s32 %s78, 1
    %s80 = scalar_select %p77, %s78, %s79
    %p83 = pneg %p77
    %p84 = scmp.eq.s32.totalorder %s15, 3
    %p85 = por %p83, %p84
    %p86 = scmp.ne.s32.totalorder %s78, %s81
    %p87 = scmp.eq.s32.totalorder %s15, 0
    %p88 = por %p86, %p87
    %p89 = scmp.ne.s32.totalorder %s78, %s81
    %p90 = scmp.eq.s32.totalorder %s20, 3
    %p91 = por %p89, %p90
    %p92 = scmp.ne.s32.totalorder %s81, %s82
    %p93 = scmp.eq.s32.totalorder %s20, 0
    %p94 = por %p92, %p93
    %p95 = scmp.ne.s32.totalorder %s81, %s82
    %p96 = scmp.eq.s32.totalorder %s21, 3
    %p97 = por %p95, %p96
    %p99 = scmp.ne.s32.totalorder %s82, %s98
    %p100 = scmp.eq.s32.totalorder %s21, 0
    %p101 = por %p99, %p100
    %s102 = ssub.s32 %s22, %s41
    %s103 = ssub.s32 %s24, %s33
    %s104 = sor.u32 %s102, %s103
    %p105 = scmp.eq.s32.totalorder %s104, 0
    %s107 = sadd.s32 %s106, 1
    %s108 = scalar_select %p105, %s106, %s107
    %p111 = pneg %p105
    %p112 = scmp.eq.s32.totalorder %s15, 3
    %p113 = por %p111, %p112
    %p114 = scmp.ne.s32.totalorder %s106, %s109
    %p115 = scmp.eq.s32.totalorder %s15, 0
    %p116 = por %p114, %p115
    %p117 = scmp.ne.s32.totalorder %s106, %s109
    %p118 = scmp.eq.s32.totalorder %s20, 3
    %p119 = por %p117, %p118
    %p120 = scmp.ne.s32.totalorder %s109, %s110
    %p121 = scmp.eq.s32.totalorder %s20, 0
    %p122 = por %p120, %p121
    %p123 = scmp.ne.s32.totalorder %s109, %s110
    %p124 = scmp.eq.s32.totalorder %s21, 3
    %p125 = por %p123, %p124
    %p127 = scmp.ne.s32.totalorder %s110, %s126
    %p128 = scmp.eq.s32.totalorder %s21, 0
    %p129 = por %p127, %p128
    %s130 = ssub.s32 %s22, %s41
    %s131 = ssub.s32 %s24, %s33
    %s132 = sor.u32 %s130, %s131
    %p133 = scmp.eq.s32.totalorder %s132, 0
    %s135 = sadd.s32 %s134, 1
    %s136 = scalar_select %p133, %s134, %s135
    %p139 = pneg %p133
    %p140 = scmp.eq.s32.totalorder %s15, 3
    %p141 = por %p139, %p140
    %p142 = scmp.ne.s32.totalorder %s134, %s137
    %p143 = scmp.eq.s32.totalorder %s15, 0
    %p144 = por %p142, %p143
    %p145 = scmp.ne.s32.totalorder %s134, %s137
    %p146 = scmp.eq.s32.totalorder %s20, 3
    %p147 = por %p145, %p146
    %p148 = scmp.ne.s32.totalorder %s137, %s138
    %p149 = scmp.eq.s32.totalorder %s20, 0
    %p150 = por %p148, %p149
    %p151 = scmp.ne.s32.totalorder %s137, %s138
    %p152 = scmp.eq.s32.totalorder %s21, 3
    %p153 = por %p151, %p152
    %p155 = scmp.ne.s32.totalorder %s138, %s154
    %p156 = scmp.eq.s32.totalorder %s21, 0
    %p157 = por %p155, %p156
    %s159 = sadd.s32 %s158, 1
    %p162 = scmp.eq.s32.totalorder %s15, 3
    %p163 = scmp.ne.s32.totalorder %s158, %s160
    %p164 = scmp.eq.s32.totalorder %s15, 0
    %p165 = por %p163, %p164
    %p166 = scmp.ne.s32.totalorder %s158, %s160
    %p167 = scmp.eq.s32.totalorder %s20, 3
    %p168 = por %p166, %p167
    %p169 = scmp.ne.s32.totalorder %s160, %s161
    %p170 = scmp.eq.s32.totalorder %s20, 0
    %p171 = por %p169, %p170
    %p172 = scmp.ne.s32.totalorder %s160, %s161
    %p173 = scmp.eq.s32.totalorder %s21, 3
    %p174 = por %p172, %p173
    %p176 = scmp.ne.s32.totalorder %s161, %s175
    %p177 = scmp.eq.s32.totalorder %s21, 0
    %p178 = por %p176, %p177
    %s180 = sadd.s32 %s179, 1
    %p183 = scmp.eq.s32.totalorder %s15, 3
    %p184 = scmp.ne.s32.totalorder %s179, %s181
    %p185 = scmp.eq.s32.totalorder %s15, 0
    %p186 = por %p184, %p185
    %p187 = scmp.ne.s32.totalorder %s179, %s181
    %p188 = scmp.eq.s32.totalorder %s20, 3
    %p189 = por %p187, %p188
    %p190 = scmp.ne.s32.totalorder %s181, %s182
    %p191 = scmp.eq.s32.totalorder %s20, 0
    %p192 = por %p190, %p191
    %p193 = scmp.ne.s32.totalorder %s181, %s182
    %p194 = scmp.eq.s32.totalorder %s21, 3
    %p195 = por %p193, %p194
    %p197 = scmp.ne.s32.totalorder %s182, %s196
    %p198 = scmp.eq.s32.totalorder %s21, 0
    %p199 = por %p197, %p198
    %s201 = sadd.s32 %s200, 1
    %p204 = scmp.eq.s32.totalorder %s15, 3
    %p205 = scmp.ne.s32.totalorder %s200, %s202
    %p206 = scmp.eq.s32.totalorder %s15, 0
    %p207 = por %p205, %p206
    %p208 = scmp.ne.s32.totalorder %s200, %s202
    %p209 = scmp.eq.s32.totalorder %s20, 3
    %p210 = por %p208, %p209
    %p211 = scmp.ne.s32.totalorder %s202, %s203
    %p212 = scmp.eq.s32.totalorder %s20, 0
    %p213 = por %p211, %p212
    %p214 = scmp.ne.s32.totalorder %s202, %s203
    %p215 = scmp.eq.s32.totalorder %s21, 3
    %p216 = por %p214, %p215
    %p218 = scmp.ne.s32.totalorder %s203, %s217
    %p219 = scmp.eq.s32.totalorder %s21, 0
    %p220 = por %p218, %p219
    %s221 = ssub.s32 %s22, %s41
    %s222 = ssub.s32 %s23, %s37
    %s223 = sor.u32 %s221, %s222
    %s224 = ssub.s32 %s24, %s33
    %s225 = sor.u32 %s223, %s224
    %p226 = scmp.eq.s32.totalorder %s225, 0
    %s228 = sadd.s32 %s227, 1
    %s229 = scalar_select %p226, %s227, %s228
    %p232 = pneg %p226
    %p233 = scmp.eq.s32.totalorder %s15, 3
    %p234 = por %p232, %p233
    %p235 = scmp.ne.s32.totalorder %s227, %s230
    %p236 = scmp.eq.s32.totalorder %s15, 0
    %p237 = por %p235, %p236
    %p238 = scmp.ne.s32.totalorder %s227, %s230
    %p239 = scmp.eq.s32.totalorder %s20, 3
    %p240 = por %p238, %p239
    %p241 = scmp.ne.s32.totalorder %s230, %s231
    %p242 = scmp.eq.s32.totalorder %s20, 0
    %p243 = por %p241, %p242
    %p244 = scmp.ne.s32.totalorder %s230, %s231
    %p245 = scmp.eq.s32.totalorder %s21, 3
    %p246 = por %p244, %p245
    %p248 = scmp.ne.s32.totalorder %s231, %s247
    %p249 = scmp.eq.s32.totalorder %s21, 0
    %p250 = por %p248, %p249
    %s251 = ssub.s32 %s22, %s41
    %s252 = ssub.s32 %s23, %s37
    %s253 = sor.u32 %s251, %s252
    %s254 = ssub.s32 %s24, %s33
    %s255 = sor.u32 %s253, %s254
    %p256 = scmp.eq.s32.totalorder %s255, 0
    %s258 = sadd.s32 %s257, 1
    %s259 = scalar_select %p256, %s257, %s258
    %p262 = pneg %p256
    %p263 = scmp.eq.s32.totalorder %s15, 3
    %p264 = por %p262, %p263
    %p265 = scmp.ne.s32.totalorder %s257, %s260
    %p266 = scmp.eq.s32.totalorder %s15, 0
    %p267 = por %p265, %p266
    %p268 = scmp.ne.s32.totalorder %s257, %s260
    %p269 = scmp.eq.s32.totalorder %s20, 3
    %p270 = por %p268, %p269
    %p271 = scmp.ne.s32.totalorder %s260, %s261
    %p272 = scmp.eq.s32.totalorder %s20, 0
    %p273 = por %p271, %p272
    %p274 = scmp.ne.s32.totalorder %s260, %s261
    %p275 = scmp.eq.s32.totalorder %s21, 3
    %p276 = por %p274, %p275
    %p278 = scmp.ne.s32.totalorder %s261, %s277
    %p279 = scmp.eq.s32.totalorder %s21, 0
    %p280 = por %p278, %p279
    %p281 = scmp.le.s32.totalorder 1, %s15
    %p282 = scmp.lt.s32.totalorder %s15, 5
    %p283 = pnand %p281, %p282
    %p284 = pneg %p283
    // Predicated region
    $region9: #{self_attention_forward.5} parent=5 // pred_check
      _
    $region10: #{self_attention_forward.5} parent=5 // pred_check_branch
      %286 = sbr.rel (%p283) target = $region12
    $region11: #{self_attention_forward.5} parent=5 // pred_region
      %s287 = ssub.s32 %s15, 1
      // Predicated region
      $region13: #{self_attention_forward.5} parent=11 // pred_check
        %p288 = pneg %p171
      $region14: #{self_attention_forward.5} parent=11 // pred_check_branch
        %290 = sbr.rel (%p288) target = $region16
      $region15: #{self_attention_forward.5} parent=11 // pred_region
        _
      $region16: #{self_attention_forward.5} parent=11 // pred_fallthru
        _
      // Predicated region
      $region17: #{self_attention_forward.5} parent=11 // pred_check
        %p291 = pneg %p192
      $region18: #{self_attention_forward.5} parent=11 // pred_check_branch
        %293 = sbr.rel (%p291) target = $region20
      $region19: #{self_attention_forward.5} parent=11 // pred_region
        _
      $region20: #{self_attention_forward.5} parent=11 // pred_fallthru
        _
      // Predicated region
      $region21: #{self_attention_forward.5} parent=11 // pred_check
        %p294 = pneg %p213
      $region22: #{self_attention_forward.5} parent=11 // pred_check_branch
        %296 = sbr.rel (%p294) target = $region24
      $region23: #{self_attention_forward.5} parent=11 // pred_region
        _
      $region24: #{self_attention_forward.5} parent=11 // pred_fallthru
        _
    $region12: #{self_attention_forward.5} parent=5 // pred_fallthru
      _
    %p297 = scmp.lt.s32.totalorder %s15, 4
    // Predicated region
    $region25: #{self_attention_forward.5} parent=5 // pred_check
      %p298 = pneg %p297
    $region26: #{self_attention_forward.5} parent=5 // pred_check_branch
      %300 = sbr.rel (%p298) target = $region28
    $region27: #{self_attention_forward.5} parent=5 // pred_region
      // Predicated region
      $region29: #{self_attention_forward.5} parent=27 // pred_check
        %p301 = pneg %p58
      $region30: #{self_attention_forward.5} parent=27 // pred_check_branch
        %303 = sbr.rel (%p301) target = $region32
      $region31: #{self_attention_forward.5} parent=27 // pred_region
        %p304 = scmp.lt.s32.totalorder %s23, 1
        %s305 = scalar_select %p304, %s23, 1
        %p306 = scmp.lt.s32.totalorder %s22, 1
        %s307 = scalar_select %p306, %s22, 1
        %p308 = scmp.lt.s32.totalorder %s24, 0
        %s309 = scalar_select %p308, %s24, 0
        %s310 = sadd.s32 %s309, %s307
        %s311 = smul.addr %s305, 2
        %s312 = sadd.s32 %s310, %s311
        %s313 = smul.addr %s312, 8
        %s314 = scalar_lea.vmem %s0, %s313
      $region32: #{self_attention_forward.5} parent=27 // pred_fallthru
        _
      // Predicated region
      $region33: #{self_attention_forward.5} parent=27 // pred_check
        %p315 = pneg %p88
      $region34: #{self_attention_forward.5} parent=27 // pred_check_branch
        %317 = sbr.rel (%p315) target = $region36
      $region35: #{self_attention_forward.5} parent=27 // pred_region
        %p318 = scmp.lt.s32.totalorder %s23, 1
        %s319 = scalar_select %p318, %s23, 1
        %p320 = scmp.lt.s32.totalorder %s22, 1
        %s321 = scalar_select %p320, %s22, 1
        %p322 = scmp.lt.s32.totalorder %s24, 0
        %s323 = scalar_select %p322, %s24, 0
        %s324 = sadd.s32 %s323, %s321
        %s325 = smul.addr %s319, 2
        %s326 = sadd.s32 %s324, %s325
        %s327 = sadd.s32 %s326, 4
        %s328 = smul.addr %s327, 8
        %s329 = scalar_lea.vmem %s1, %s328
      $region36: #{self_attention_forward.5} parent=27 // pred_fallthru
        _
      // Predicated region
      $region37: #{self_attention_forward.5} parent=27 // pred_check
        %p330 = pneg %p116
      $region38: #{self_attention_forward.5} parent=27 // pred_check_branch
        %332 = sbr.rel (%p330) target = $region40
      $region39: #{self_attention_forward.5} parent=27 // pred_region
        %p333 = scmp.lt.s32.totalorder %s22, 1
        %s334 = scalar_select %p333, %s22, 1
        %p335 = scmp.lt.s32.totalorder %s24, 0
        %s336 = scalar_select %p335, %s24, 0
        %s337 = sadd.s32 %s336, %s334
        %s338 = smul.addr %s337, 8
        %s339 = scalar_lea.vmem %s2, %s338
      $region40: #{self_attention_forward.5} parent=27 // pred_fallthru
        _
      // Predicated region
      $region41: #{self_attention_forward.5} parent=27 // pred_check
        %p340 = pneg %p144
      $region42: #{self_attention_forward.5} parent=27 // pred_check_branch
        %342 = sbr.rel (%p340) target = $region44
      $region43: #{self_attention_forward.5} parent=27 // pred_region
        %p343 = scmp.lt.s32.totalorder %s22, 1
        %s344 = scalar_select %p343, %s22, 1
        %p345 = scmp.lt.s32.totalorder %s24, 0
        %s346 = scalar_select %p345, %s24, 0
        %s347 = sadd.s32 %s346, %s344
        %s348 = smul.addr %s347, 8
        %s349 = scalar_lea.vmem %s3, %s348
      $region44: #{self_attention_forward.5} parent=27 // pred_fallthru
        _
    $region28: #{self_attention_forward.5} parent=5 // pred_fallthru
      _
    %p350 = scmp.le.s32.totalorder 1, %s15
    %p351 = scmp.lt.s32.totalorder %s15, 5
    %p352 = pnand %p350, %p351
    %p353 = pneg %p352
    // Predicated region
    $region45: #{self_attention_forward.5} parent=5 // pred_check
      _
    $region46: #{self_attention_forward.5} parent=5 // pred_check_branch
      %355 = sbr.rel (%p352) target = $region48
    $region47: #{self_attention_forward.5} parent=5 // pred_region
      %s356 = ssub.s32 %s15, 1
      %p357 = scmp.lt.s32.totalorder %s26, 1
      %s358 = scalar_select %p357, %s26, 1
      %p359 = scmp.lt.s32.totalorder %s25, 1
      %s360 = scalar_select %p359, %s25, 1
      %p361 = scmp.lt.s32.totalorder %s27, 0
      %s362 = scalar_select %p361, %s27, 0
      %s363 = sadd.s32 %s362, %s360
      %s364 = smul.addr %s358, 2
      %s365 = sadd.s32 %s363, %s364
      %s366 = smul.addr %s365, 8
      %s367 = scalar_lea.vmem %s0, %s366
      %p368 = pneg %p64
      %p369 = pneg %p61
      %p370 = scmp.lt.s32.totalorder %s26, 1
      %s371 = scalar_select %p370, %s26, 1
      %p372 = scmp.lt.s32.totalorder %s25, 1
      %s373 = scalar_select %p372, %s25, 1
      %p374 = scmp.lt.s32.totalorder %s27, 0
      %s375 = scalar_select %p374, %s27, 0
      %s376 = sadd.s32 %s375, %s373
      %s377 = smul.addr %s371, 2
      %s378 = sadd.s32 %s376, %s377
      %s379 = sadd.s32 %s378, 4
      %s380 = smul.addr %s379, 8
      %s381 = scalar_lea.vmem %s1, %s380
      %p382 = pneg %p94
      %p383 = pneg %p91
      %p384 = scmp.lt.s32.totalorder %s25, 1
      %s385 = scalar_select %p384, %s25, 1
      %p386 = scmp.lt.s32.totalorder %s27, 0
      %s387 = scalar_select %p386, %s27, 0
      %s388 = sadd.s32 %s387, %s385
      %s389 = smul.addr %s388, 8
      %s390 = scalar_lea.vmem %s2, %s389
      %p391 = pneg %p122
      %p392 = pneg %p119
      %p393 = scmp.lt.s32.totalorder %s25, 1
      %s394 = scalar_select %p393, %s25, 1
      %p395 = scmp.lt.s32.totalorder %s27, 0
      %s396 = scalar_select %p395, %s27, 0
      %s397 = sadd.s32 %s396, %s394
      %s398 = smul.addr %s397, 8
      %s399 = scalar_lea.vmem %s3, %s398
      %p400 = pneg %p150
      %p401 = pneg %p147
      %p402 = pneg %p171
      %p403 = pneg %p168
      %p404 = pneg %p192
      %p405 = pneg %p189
      %p406 = pneg %p213
      %p407 = pneg %p210
      %p408 = pneg %p243
      %p409 = pneg %p240
      %p410 = scmp.lt.s32.totalorder %s25, 1
      %s411 = scalar_select %p410, %s25, 1
      %p412 = scmp.lt.s32.totalorder %s26, 1
      %s413 = scalar_select %p412, %s26, 1
      %p414 = scmp.lt.s32.totalorder %s27, 0
      %s415 = scalar_select %p414, %s27, 0
      %s416 = sadd.s32 %s415, %s413
      %s417 = smul.addr %s411, 2
      %s418 = sadd.s32 %s416, %s417
      %s419 = smul.addr %s418, 8
      %s420 = scalar_lea.vmem %s7, %s419
      %p421 = pneg %p273
      %p422 = pneg %p270
      %p423 = scmp.lt.s32.totalorder %s25, 1
      %s424 = scalar_select %p423, %s25, 1
      %p425 = scmp.lt.s32.totalorder %s26, 1
      %s426 = scalar_select %p425, %s26, 1
      %p427 = scmp.lt.s32.totalorder %s27, 0
      %s428 = scalar_select %p427, %s27, 0
      %s429 = sadd.s32 %s428, %s426
      %s430 = smul.addr %s424, 2
      %s431 = sadd.s32 %s429, %s430
      %s432 = smul.addr %s431, 8
      %s433 = scalar_lea.vmem %s8, %s432
      %p434 = scmp.lt.s32.totalorder %s26, 1
      %s435 = scalar_select %p434, %s26, 1
      %p436 = scmp.lt.s32.totalorder %s25, 1
      %s437 = scalar_select %p436, %s25, 1
      %p438 = scmp.lt.s32.totalorder %s27, 0
      %s439 = scalar_select %p438, %s27, 0
      %s440 = sadd.s32 %s439, %s437
      %s441 = smul.addr %s435, 2
      %s442 = sadd.s32 %s440, %s441
      %s443 = smul.addr %s442, 8
      %s444 = scalar_lea.vmem %s0, %s443
      %p445 = scmp.lt.s32.totalorder %s26, 1
      %s446 = scalar_select %p445, %s26, 1
      %p447 = scmp.lt.s32.totalorder %s25, 1
      %s448 = scalar_select %p447, %s25, 1
      %p449 = scmp.lt.s32.totalorder %s27, 0
      %s450 = scalar_select %p449, %s27, 0
      %s451 = sadd.s32 %s450, %s448
      %s452 = smul.addr %s446, 2
      %s453 = sadd.s32 %s451, %s452
      %s454 = sadd.s32 %s453, 4
      %s455 = smul.addr %s454, 8
      %s456 = scalar_lea.vmem %s1, %s455
      %p457 = scmp.lt.s32.totalorder %s25, 1
      %s458 = scalar_select %p457, %s25, 1
      %p459 = scmp.lt.s32.totalorder %s27, 0
      %s460 = scalar_select %p459, %s27, 0
      %s461 = sadd.s32 %s460, %s458
      %s462 = smul.addr %s461, 8
      %s463 = scalar_lea.vmem %s2, %s462
      %p464 = scmp.lt.s32.totalorder %s25, 1
      %s465 = scalar_select %p464, %s25, 1
      %p466 = scmp.lt.s32.totalorder %s27, 0
      %s467 = scalar_select %p466, %s27, 0
      %s468 = sadd.s32 %s467, %s465
      %s469 = smul.addr %s468, 8
      %s470 = scalar_lea.vmem %s3, %s469
      %p471 = scmp.lt.s32.totalorder %s25, 1
      %s472 = scalar_select %p471, %s25, 1
      %p473 = scmp.lt.s32.totalorder %s26, 1
      %s474 = scalar_select %p473, %s26, 1
      %p475 = scmp.lt.s32.totalorder %s27, 0
      %s476 = scalar_select %p475, %s27, 0
      %s477 = sadd.s32 %s476, %s474
      %s478 = smul.addr %s472, 2
      %s479 = sadd.s32 %s477, %s478
      %s480 = smul.addr %s479, 8
      %s481 = scalar_lea.vmem %s7, %s480
      %p482 = scmp.lt.s32.totalorder %s25, 1
      %s483 = scalar_select %p482, %s25, 1
      %p484 = scmp.lt.s32.totalorder %s26, 1
      %s485 = scalar_select %p484, %s26, 1
      %p486 = scmp.lt.s32.totalorder %s27, 0
      %s487 = scalar_select %p486, %s27, 0
      %s488 = sadd.s32 %s487, %s485
      %s489 = smul.addr %s483, 2
      %s490 = sadd.s32 %s488, %s489
      %s491 = smul.addr %s490, 8
      %s492 = scalar_lea.vmem %s8, %s491
      %v493 = vld [vmem:[%s463] sm:$0xff]
      %v494 = vld [vmem:[%s470] sm:$0xff]
      %v495 = vld [vmem:[%s6] sm:$0xff]
      %v496 = vld [vmem:[%s6 + $0x8] sm:$0xff]
      %v497 = vld [vmem:[%s444] sm:$0xff]
      %v498 = vld [vmem:[%s4] sm:$0x1]
      %v499 = vmul.f32 %v497, %v497
      %vm500 = vcmask 130048
      %v501 = vsel %vm500, %v499, 0.0
      %502 = vadd.xlane.f32.xlu0 %v501
      %v503 = vpop.xlane.xlu0 %502
      %v504 = vrcp.pop 16.0
      %v505 = vmul.f32 %v503, %v504
      %v506 = vadd.f32 %v505, 1e-06
      %v507 = vrsqrt.pop %v506
      %v508 = vmul.f32 %v497, %v507
      %v510 = vlaneseq
      %v511 = vshrl.u32 %v510, 7
      %v512 = vsub.s32 0, %v511
      %v513 = vrot.slane %v498, %v512
      %v515 = vmul.f32 %v508, %v513
      %v517 = vsel %vm500, %v515, 0
      %519 = vmatprep.subr.mxu0 0.0
      %520 = vmatpush1.msra.mxu0 %v495
      %521 = vmatprep.subr.mxu0 0.0
      %522 = vmatpush1.msra.mxu0 %v496
      %523 = vmatprep.subr.mxu0 0.0
      %524 = vmatpush1.msra.mxu0 0.0
      %525 = vmatprep.subr.mxu0 0.0
      %526 = vmatpush1.msra.mxu0 0.0
      %527 = vmatprep.subr.mxu0 0.0
      %528 = vmatpush1.msra.mxu0 0.0
      %529 = vmatprep.subr.mxu0 0.0
      %530 = vmatpush1.msra.mxu0 0.0
      %531 = vmatprep.subr.mxu0 0.0
      %532 = vmatpush1.msra.mxu0 0.0
      %533 = vmatprep.subr.mxu0 0.0
      %534 = vmatpush1.msra.mxu0 0.0
      %535 = vmatprep.subr.mxu0 0.0
      %536 = vmatpush1.msra.mxu0 0.0
      %537 = vmatprep.subr.mxu0 0.0
      %538 = vmatpush1.msra.mxu0 0.0
      %539 = vmatprep.subr.mxu0 0.0
      %540 = vmatpush1.msra.mxu0 0.0
      %541 = vmatprep.subr.mxu0 0.0
      %542 = vmatpush1.msra.mxu0 0.0
      %543 = vmatprep.subr.mxu0 0.0
      %544 = vmatpush1.msra.mxu0 0.0
      %545 = vmatprep.subr.mxu0 0.0
      %546 = vmatpush1.msra.mxu0 0.0
      %547 = vmatprep.subr.mxu0 0.0
      %548 = vmatpush1.msra.mxu0 0.0
      %549 = vmatprep.subr.mxu0 0.0
      %550 = vmatpush1.msra.mxu0 0.0
      %551 = vmatprep.subr.mxu0 0.0
      %552 = vmatpush1.msra.mxu0 0.0
      %553 = vmatprep.subr.mxu0 0.0
      %554 = vmatpush1.msra.mxu0 0.0
      %555 = vmatprep.subr.mxu0 0.0
      %556 = vmatpush1.msra.mxu0 0.0
      %557 = vmatprep.subr.mxu0 0.0
      %558 = vmatpush1.msra.mxu0 0.0
      %559 = vmatprep.subr.mxu0 0.0
      %560 = vmatpush1.msra.mxu0 0.0
      %561 = vmatprep.subr.mxu0 0.0
      %562 = vmatpush1.msra.mxu0 0.0
      %563 = vmatprep.subr.mxu0 0.0
      %564 = vmatpush1.msra.mxu0 0.0
      %565 = vmatprep.subr.mxu0 0.0
      %566 = vmatpush1.msra.mxu0 0.0
      %567 = vmatprep.subr.mxu0 0.0
      %568 = vmatpush1.msra.mxu0 0.0
      %569 = vmatprep.subr.mxu0 0.0
      %570 = vmatpush1.msra.mxu0 0.0
      %571 = vmatprep.subr.mxu0 0.0
      %572 = vmatpush1.msra.mxu0 0.0
      %573 = vmatprep.subr.mxu0 0.0
      %574 = vmatpush1.msra.mxu0 0.0
      %575 = vmatprep.subr.mxu0 0.0
      %576 = vmatpush1.msra.mxu0 0.0
      %577 = vmatprep.subr.mxu0 0.0
      %578 = vmatpush1.msra.mxu0 0.0
      %579 = vmatprep.subr.mxu0 0.0
      %580 = vmatpush1.msra.mxu0 0.0
      %581 = vmatprep.subr.mxu0 0.0
      %582 = vmatpush1.msra.mxu0 0.0
      %583 = vmatprep.mubr.f32.mxu0 0.0
      %584 = vmatmul.mubr.f32.gmra.mrb[0].mxu0 %v517
      %v585 = vpop.f32.mrb[0].mxu0
      %v586 = vadd.f32 0.0, %v585
      %v587 = vpop.f32.mrb[0].mxu0
      %588 = vdwg.mxu0
      %v589 = vmul.f32 %v493, %v515
      %v590 = vmul.f32 %v494, %v586
      %v591 = vadd.f32 %v589, %v590
      %v592 = vmul.f32 %v591, 0.25
      %593 = vst.msk [vmem:[%s481] sm:$0xff] %vm500, %v592
      %v594 = vld [vmem:[%s456] sm:$0xff]
      %v595 = vld [vmem:[%s5] sm:$0x1]
      %v596 = vmul.f32 %v594, %v594
      %v597 = vsel %vm500, %v596, 0.0
      %598 = vadd.xlane.f32.xlu0 %v597
      %v599 = vpop.xlane.xlu0 %598
      %v600 = vmul.f32 %v599, %v504
      %v601 = vadd.f32 %v600, 1e-06
      %v602 = vrsqrt.pop %v601
      %v603 = vmul.f32 %v594, %v602
      %v605 = vlaneseq
      %v606 = vshrl.u32 %v605, 7
      %v607 = vsub.s32 0, %v606
      %v608 = vrot.slane %v595, %v607
      %v610 = vmul.f32 %v603, %v608
      %v612 = vsel %vm500, %v610, 0
      %614 = vmatprep.subr.mxu0 0.0
      %615 = vmatpush1.msra.mxu0 %v495
      %616 = vmatprep.subr.mxu0 0.0
      %617 = vmatpush1.msra.mxu0 %v496
      %618 = vmatprep.subr.mxu0 0.0
      %619 = vmatpush1.msra.mxu0 0.0
      %620 = vmatprep.subr.mxu0 0.0
      %621 = vmatpush1.msra.mxu0 0.0
      %622 = vmatprep.subr.mxu0 0.0
      %623 = vmatpush1.msra.mxu0 0.0
      %624 = vmatprep.subr.mxu0 0.0
      %625 = vmatpush1.msra.mxu0 0.0
      %626 = vmatprep.subr.mxu0 0.0
      %627 = vmatpush1.msra.mxu0 0.0
      %628 = vmatprep.subr.mxu0 0.0
      %629 = vmatpush1.msra.mxu0 0.0
      %630 = vmatprep.subr.mxu0 0.0
      %631 = vmatpush1.msra.mxu0 0.0
      %632 = vmatprep.subr.mxu0 0.0
      %633 = vmatpush1.msra.mxu0 0.0
      %634 = vmatprep.subr.mxu0 0.0
      %635 = vmatpush1.msra.mxu0 0.0
      %636 = vmatprep.subr.mxu0 0.0
      %637 = vmatpush1.msra.mxu0 0.0
      %638 = vmatprep.subr.mxu0 0.0
      %639 = vmatpush1.msra.mxu0 0.0
      %640 = vmatprep.subr.mxu0 0.0
      %641 = vmatpush1.msra.mxu0 0.0
      %642 = vmatprep.subr.mxu0 0.0
      %643 = vmatpush1.msra.mxu0 0.0
      %644 = vmatprep.subr.mxu0 0.0
      %645 = vmatpush1.msra.mxu0 0.0
      %646 = vmatprep.subr.mxu0 0.0
      %647 = vmatpush1.msra.mxu0 0.0
      %648 = vmatprep.subr.mxu0 0.0
      %649 = vmatpush1.msra.mxu0 0.0
      %650 = vmatprep.subr.mxu0 0.0
      %651 = vmatpush1.msra.mxu0 0.0
      %652 = vmatprep.subr.mxu0 0.0
      %653 = vmatpush1.msra.mxu0 0.0
      %654 = vmatprep.subr.mxu0 0.0
      %655 = vmatpush1.msra.mxu0 0.0
      %656 = vmatprep.subr.mxu0 0.0
      %657 = vmatpush1.msra.mxu0 0.0
      %658 = vmatprep.subr.mxu0 0.0
      %659 = vmatpush1.msra.mxu0 0.0
      %660 = vmatprep.subr.mxu0 0.0
      %661 = vmatpush1.msra.mxu0 0.0
      %662 = vmatprep.subr.mxu0 0.0
      %663 = vmatpush1.msra.mxu0 0.0
      %664 = vmatprep.subr.mxu0 0.0
      %665 = vmatpush1.msra.mxu0 0.0
      %666 = vmatprep.subr.mxu0 0.0
      %667 = vmatpush1.msra.mxu0 0.0
      %668 = vmatprep.subr.mxu0 0.0
      %669 = vmatpush1.msra.mxu0 0.0
      %670 = vmatprep.subr.mxu0 0.0
      %671 = vmatpush1.msra.mxu0 0.0
      %672 = vmatprep.subr.mxu0 0.0
      %673 = vmatpush1.msra.mxu0 0.0
      %674 = vmatprep.subr.mxu0 0.0
      %675 = vmatpush1.msra.mxu0 0.0
      %676 = vmatprep.subr.mxu0 0.0
      %677 = vmatpush1.msra.mxu0 0.0
      %678 = vmatprep.mubr.f32.mxu0 0.0
      %679 = vmatmul.mubr.f32.gmra.mrb[0].mxu0 %v612
      %v680 = vpop.f32.mrb[0].mxu0
      %v681 = vadd.f32 0.0, %v680
      %v682 = vpop.f32.mrb[0].mxu0
      %683 = vdwg.mxu0
      %v684 = vmul.f32 %v493, %v610
      %v685 = vmul.f32 %v494, %v681
      %v686 = vadd.f32 %v684, %v685
      %687 = vst.msk [vmem:[%s492] sm:$0xff] %vm500, %v686
      %p688 = scmp.lt.s32.totalorder %s25, 1
      %s689 = scalar_select %p688, %s25, 1
      %p690 = scmp.lt.s32.totalorder %s26, 1
      %s691 = scalar_select %p690, %s26, 1
      %p692 = scmp.lt.s32.totalorder %s27, 0
      %s693 = scalar_select %p692, %s27, 0
      %s694 = sadd.s32 %s693, %s691
      %s695 = smul.addr %s689, 2
      %s696 = sadd.s32 %s694, %s695
      %s697 = smul.addr %s696, 8
      %s698 = scalar_lea.vmem %s7, %s697
      %p699 = scmp.lt.s32.totalorder %s25, 1
      %s700 = scalar_select %p699, %s25, 1
      %p701 = scmp.lt.s32.totalorder %s26, 1
      %s702 = scalar_select %p701, %s26, 1
      %p703 = scmp.lt.s32.totalorder %s27, 0
      %s704 = scalar_select %p703, %s27, 0
      %s705 = sadd.s32 %s704, %s702
      %s706 = smul.addr %s700, 2
      %s707 = sadd.s32 %s705, %s706
      %s708 = smul.addr %s707, 8
      %s709 = scalar_lea.vmem %s8, %s708
      // Predicated region
      $region49: #{self_attention_forward.5} parent=47 // pred_check
        %p710 = pneg %p240
      $region50: #{self_attention_forward.5} parent=47 // pred_check_branch
        %712 = sbr.rel (%p710) target = $region52
      $region51: #{self_attention_forward.5} parent=47 // pred_region
        _
      $region52: #{self_attention_forward.5} parent=47 // pred_fallthru
        _
      // Predicated region
      $region53: #{self_attention_forward.5} parent=47 // pred_check
        %p713 = pneg %p270
      $region54: #{self_attention_forward.5} parent=47 // pred_check_branch
        %715 = sbr.rel (%p713) target = $region56
      $region55: #{self_attention_forward.5} parent=47 // pred_region
        _
      $region56: #{self_attention_forward.5} parent=47 // pred_fallthru
        _
    $region48: #{self_attention_forward.5} parent=5 // pred_fallthru
      _
    %p716 = scmp.le.s32.totalorder 2, %s15
    // Predicated region
    $region57: #{self_attention_forward.5} parent=5 // pred_check
      %p717 = pneg %p716
    $region58: #{self_attention_forward.5} parent=5 // pred_check_branch
      %719 = sbr.rel (%p717) target = $region60
    $region59: #{self_attention_forward.5} parent=5 // pred_region
      %s720 = ssub.s32 %s15, 2
      // Predicated region
      $region61: #{self_attention_forward.5} parent=59 // pred_check
        %p721 = pneg %p246
      $region62: #{self_attention_forward.5} parent=59 // pred_check_branch
        %723 = sbr.rel (%p721) target = $region64
      $region63: #{self_attention_forward.5} parent=59 // pred_region
        %p724 = scmp.lt.s32.totalorder %s28, 1
        %s725 = scalar_select %p724, %s28, 1
        %p726 = scmp.lt.s32.totalorder %s29, 1
        %s727 = scalar_select %p726, %s29, 1
        %p728 = scmp.lt.s32.totalorder %s30, 0
        %s729 = scalar_select %p728, %s30, 0
        %s730 = sadd.s32 %s729, %s727
        %s731 = smul.addr %s725, 2
        %s732 = sadd.s32 %s730, %s731
        %s733 = smul.addr %s732, 8
        %s734 = scalar_lea.vmem %s7, %s733
      $region64: #{self_attention_forward.5} parent=59 // pred_fallthru
        _
      // Predicated region
      $region65: #{self_attention_forward.5} parent=59 // pred_check
        %p735 = pneg %p276
      $region66: #{self_attention_forward.5} parent=59 // pred_check_branch
        %737 = sbr.rel (%p735) target = $region68
      $region67: #{self_attention_forward.5} parent=59 // pred_region
        %p738 = scmp.lt.s32.totalorder %s28, 1
        %s739 = scalar_select %p738, %s28, 1
        %p740 = scmp.lt.s32.totalorder %s29, 1
        %s741 = scalar_select %p740, %s29, 1
        %p742 = scmp.lt.s32.totalorder %s30, 0
        %s743 = scalar_select %p742, %s30, 0
        %s744 = sadd.s32 %s743, %s741
        %s745 = smul.addr %s739, 2
        %s746 = sadd.s32 %s744, %s745
        %s747 = smul.addr %s746, 8
        %s748 = scalar_lea.vmem %s8, %s747
      $region68: #{self_attention_forward.5} parent=59 // pred_fallthru
        _
    $region60: #{self_attention_forward.5} parent=5 // pred_fallthru
      _
  $region6: #{self_attention_forward.5} parent=0 // loop_footer
    %s19 = sadd.s32 1, %s15
  $region7: #{self_attention_forward.5} parent=0 // loop_footer_branch
    %14 = sbr.rel target = $region3
  $region8: #{self_attention_forward.5} parent=0 // loop_exit
    _

// kernel: self_attention_forward.6
$region0: #{self_attention_forward.6}
  #allocation0 [shape = 'u32[]', space=smem, size = 0x4, offset = 0x4, fixed_abs, tag = 'smem constant byte address 0x4 - core index']
  #allocation1 [shape = 'u32[144,128]{1,0:T(1,128)}', space=vmem, size = 0x12000, scoped, tag = 'internal scratch']
  #allocation2 [shape = 'f32[8,1]{1,0:T(8,128)}', space=vmem, size = 0x1000, scoped, tag = 'scratch operand']
  #allocation3 [shape = 'f32[8,1]{1,0:T(8,128)}', space=vmem, size = 0x1000, scoped, tag = 'scratch operand']
  #allocation4 [shape = 'f32[8,16]{1,0:T(8,128)}', space=vmem, size = 0x1000, scoped, tag = 'scratch operand']
  %s0 = inlined_call_operand.vmem [shape: f32[2,2,8,16], index: 0, kind: input, shape index: {}]
  %s1 = inlined_call_operand.vmem [shape: f32[2,2,8,16], index: 1, kind: input, shape index: {}]
  %s2 = inlined_call_operand.vmem [shape: f32[3,2,2,8,16], index: 2, kind: input, shape index: {}]
  %s3 = inlined_call_operand.vmem [shape: f32[2,2,8,16], index: 3, kind: output, shape index: {}]
  %s4 = sld [smem:[#allocation0]]
  $region53: #{self_attention_forward.6} parent=0
    _
  %s6 = ssub.s32 1, %s4
  %s7 = scalar_select 0, %s6, %s4
  loop: start=0, step=1, limit=6
  $region2: #{self_attention_forward.6} parent=0 // loop_pre_header
    _
  $region3: #{self_attention_forward.6} parent=0 // loop_header
    %s9 = sphi 0, %s13
    %p10 = scmp.ge.s32.totalorder %s9, 6
    %s16 = sphi 0, %s42
    %s17 = sphi 0, %s38
    %s18 = sphi 0, %s34
    %s19 = sphi 0, %s30
    %s20 = sphi 0, %s16
    %s21 = sphi 0, %s17
    %s22 = sphi 0, %s18
    %s23 = sphi 0, %s19
    %s24 = sphi 0, %s20
    %s25 = sphi 0, %s21
    %s26 = sphi 0, %s22
    %s27 = sphi 0, %s23
    %s49 = sphi 0, %s51
    %s52 = sphi 0, %s49
    %s53 = sphi 0, %s52
    %s69 = sphi 0, %s53
    %s79 = sphi 0, %s81
    %s82 = sphi 0, %s79
    %s83 = sphi 0, %s82
    %s99 = sphi 0, %s83
    %s109 = sphi 0, %s111
    %s112 = sphi 0, %s109
    %s113 = sphi 0, %s112
    %s129 = sphi 0, %s113
    %s139 = sphi 0, %s141
    %s142 = sphi 0, %s139
    %s143 = sphi 0, %s142
    %s159 = sphi 0, %s143
  $region4: #{self_attention_forward.6} parent=0 // loop_header_branch
    %12 = sbr.rel (%p10) target = $region8
  $region5: #{self_attention_forward.6} parent=0 // loop_body
    %s14 = ssub.s32 %s9, 1
    %s15 = ssub.s32 %s9, 2
    %s28 = sadd.s32 1, %s19
    %p29 = scmp.ge.s32.totalorder %s28, 1
    %s30 = scalar_select %p29, 0, %s28
    %s31 = sadd.s32 1, %s18
    %s32 = scalar_select %p29, %s31, %s18
    %p33 = scmp.ge.s32.totalorder %s32, 1
    %s34 = scalar_select %p33, 0, %s32
    %s35 = sadd.s32 1, %s17
    %s36 = scalar_select %p33, %s35, %s17
    %p37 = scmp.ge.s32.totalorder %s36, 2
    %s38 = scalar_select %p37, 0, %s36
    %s39 = sadd.s32 1, %s16
    %s40 = scalar_select %p37, %s39, %s16
    %p41 = scmp.ge.s32.totalorder %s40, 2
    %s42 = scalar_select %p41, 0, %s40
    %s43 = ssub.s32 %s16, %s42
    %s44 = ssub.s32 %s17, %s38
    %s45 = sor.u32 %s43, %s44
    %s46 = ssub.s32 %s18, %s34
    %s47 = sor.u32 %s45, %s46
    %p48 = scmp.eq.s32.totalorder %s47, 0
    %s50 = sadd.s32 %s49, 1
    %s51 = scalar_select %p48, %s49, %s50
    %p54 = pneg %p48
    %p55 = scmp.eq.s32.totalorder %s9, 3
    %p56 = por %p54, %p55
    %p57 = scmp.ne.s32.totalorder %s49, %s52
    %p58 = scmp.eq.s32.totalorder %s9, 0
    %p59 = por %p57, %p58
    %p60 = scmp.ne.s32.totalorder %s49, %s52
    %p61 = scmp.eq.s32.totalorder %s14, 3
    %p62 = por %p60, %p61
    %p63 = scmp.ne.s32.totalorder %s52, %s53
    %p64 = scmp.eq.s32.totalorder %s14, 0
    %p65 = por %p63, %p64
    %p66 = scmp.ne.s32.totalorder %s52, %s53
    %p67 = scmp.eq.s32.totalorder %s15, 3
    %p68 = por %p66, %p67
    %p70 = scmp.ne.s32.totalorder %s53, %s69
    %p71 = scmp.eq.s32.totalorder %s15, 0
    %p72 = por %p70, %p71
    %s73 = ssub.s32 %s16, %s42
    %s74 = ssub.s32 %s17, %s38
    %s75 = sor.u32 %s73, %s74
    %s76 = ssub.s32 %s19, %s30
    %s77 = sor.u32 %s75, %s76
    %p78 = scmp.eq.s32.totalorder %s77, 0
    %s80 = sadd.s32 %s79, 1
    %s81 = scalar_select %p78, %s79, %s80
    %p84 = pneg %p78
    %p85 = scmp.eq.s32.totalorder %s9, 3
    %p86 = por %p84, %p85
    %p87 = scmp.ne.s32.totalorder %s79, %s82
    %p88 = scmp.eq.s32.totalorder %s9, 0
    %p89 = por %p87, %p88
    %p90 = scmp.ne.s32.totalorder %s79, %s82
    %p91 = scmp.eq.s32.totalorder %s14, 3
    %p92 = por %p90, %p91
    %p93 = scmp.ne.s32.totalorder %s82, %s83
    %p94 = scmp.eq.s32.totalorder %s14, 0
    %p95 = por %p93, %p94
    %p96 = scmp.ne.s32.totalorder %s82, %s83
    %p97 = scmp.eq.s32.totalorder %s15, 3
    %p98 = por %p96, %p97
    %p100 = scmp.ne.s32.totalorder %s83, %s99
    %p101 = scmp.eq.s32.totalorder %s15, 0
    %p102 = por %p100, %p101
    %s103 = ssub.s32 %s17, %s38
    %s104 = ssub.s32 %s16, %s42
    %s105 = sor.u32 %s103, %s104
    %s106 = ssub.s32 %s19, %s30
    %s107 = sor.u32 %s105, %s106
    %p108 = scmp.eq.s32.totalorder %s107, 0
    %s110 = sadd.s32 %s109, 1
    %s111 = scalar_select %p108, %s109, %s110
    %p114 = pneg %p108
    %p115 = scmp.eq.s32.totalorder %s9, 3
    %p116 = por %p114, %p115
    %p117 = scmp.ne.s32.totalorder %s109, %s112
    %p118 = scmp.eq.s32.totalorder %s9, 0
    %p119 = por %p117, %p118
    %p120 = scmp.ne.s32.totalorder %s109, %s112
    %p121 = scmp.eq.s32.totalorder %s14, 3
    %p122 = por %p120, %p121
    %p123 = scmp.ne.s32.totalorder %s112, %s113
    %p124 = scmp.eq.s32.totalorder %s14, 0
    %p125 = por %p123, %p124
    %p126 = scmp.ne.s32.totalorder %s112, %s113
    %p127 = scmp.eq.s32.totalorder %s15, 3
    %p128 = por %p126, %p127
    %p130 = scmp.ne.s32.totalorder %s113, %s129
    %p131 = scmp.eq.s32.totalorder %s15, 0
    %p132 = por %p130, %p131
    %s133 = ssub.s32 %s16, %s42
    %s134 = ssub.s32 %s17, %s38
    %s135 = sor.u32 %s133, %s134
    %s136 = ssub.s32 %s18, %s34
    %s137 = sor.u32 %s135, %s136
    %p138 = scmp.eq.s32.totalorder %s137, 0
    %s140 = sadd.s32 %s139, 1
    %s141 = scalar_select %p138, %s139, %s140
    %p144 = pneg %p138
    %p145 = scmp.eq.s32.totalorder %s9, 3
    %p146 = por %p144, %p145
    %p147 = scmp.ne.s32.totalorder %s139, %s142
    %p148 = scmp.eq.s32.totalorder %s9, 0
    %p149 = por %p147, %p148
    %p150 = scmp.ne.s32.totalorder %s139, %s142
    %p151 = scmp.eq.s32.totalorder %s14, 3
    %p152 = por %p150, %p151
    %p153 = scmp.ne.s32.totalorder %s142, %s143
    %p154 = scmp.eq.s32.totalorder %s14, 0
    %p155 = por %p153, %p154
    %p156 = scmp.ne.s32.totalorder %s142, %s143
    %p157 = scmp.eq.s32.totalorder %s15, 3
    %p158 = por %p156, %p157
    %p160 = scmp.ne.s32.totalorder %s143, %s159
    %p161 = scmp.eq.s32.totalorder %s15, 0
    %p162 = por %p160, %p161
    %p163 = scmp.le.s32.totalorder 1, %s9
    %p164 = scmp.lt.s32.totalorder %s9, 5
    %p165 = pnand %p163, %p164
    %p166 = pneg %p165
    // Predicated region
    $region9: #{self_attention_forward.6} parent=5 // pred_check
      _
    $region10: #{self_attention_forward.6} parent=5 // pred_check_branch
      %168 = sbr.rel (%p165) target = $region12
    $region11: #{self_attention_forward.6} parent=5 // pred_region
      %s169 = ssub.s32 %s9, 1
    $region12: #{self_attention_forward.6} parent=5 // pred_fallthru
      _
    %p170 = scmp.lt.s32.totalorder %s9, 4
    // Predicated region
    $region13: #{self_attention_forward.6} parent=5 // pred_check
      %p171 = pneg %p170
    $region14: #{self_attention_forward.6} parent=5 // pred_check_branch
      %173 = sbr.rel (%p171) target = $region16
    $region15: #{self_attention_forward.6} parent=5 // pred_region
      // Predicated region
      $region17: #{self_attention_forward.6} parent=15 // pred_check
        %p174 = pneg %p59
      $region18: #{self_attention_forward.6} parent=15 // pred_check_branch
        %176 = sbr.rel (%p174) target = $region20
      $region19: #{self_attention_forward.6} parent=15 // pred_region
        %p177 = scmp.lt.s32.totalorder %s16, 1
        %s178 = scalar_select %p177, %s16, 1
        %p179 = scmp.lt.s32.totalorder %s17, 1
        %s180 = scalar_select %p179, %s17, 1
        %p181 = scmp.lt.s32.totalorder %s18, 0
        %s182 = scalar_select %p181, %s18, 0
        %s183 = sadd.s32 %s182, %s180
        %s184 = smul.addr %s178, 2
        %s185 = sadd.s32 %s183, %s184
        %s186 = smul.addr %s185, 8
        %s187 = scalar_lea.vmem %s0, %s186
      $region20: #{self_attention_forward.6} parent=15 // pred_fallthru
        _
      // Predicated region
      $region21: #{self_attention_forward.6} parent=15 // pred_check
        %p188 = pneg %p89
      $region22: #{self_attention_forward.6} parent=15 // pred_check_branch
        %190 = sbr.rel (%p188) target = $region24
      $region23: #{self_attention_forward.6} parent=15 // pred_region
        %p191 = scmp.lt.s32.totalorder %s16, 1
        %s192 = scalar_select %p191, %s16, 1
        %p193 = scmp.lt.s32.totalorder %s17, 1
        %s194 = scalar_select %p193, %s17, 1
        %p195 = scmp.lt.s32.totalorder %s19, 0
        %s196 = scalar_select %p195, %s19, 0
        %s197 = sadd.s32 %s196, %s194
        %s198 = smul.addr %s192, 2
        %s199 = sadd.s32 %s197, %s198
        %s200 = smul.addr %s199, 8
        %s201 = scalar_lea.vmem %s1, %s200
      $region24: #{self_attention_forward.6} parent=15 // pred_fallthru
        _
      // Predicated region
      $region25: #{self_attention_forward.6} parent=15 // pred_check
        %p202 = pneg %p119
      $region26: #{self_attention_forward.6} parent=15 // pred_check_branch
        %204 = sbr.rel (%p202) target = $region28
      $region27: #{self_attention_forward.6} parent=15 // pred_region
        %p205 = scmp.lt.s32.totalorder %s17, 1
        %s206 = scalar_select %p205, %s17, 1
        %p207 = scmp.lt.s32.totalorder %s16, 1
        %s208 = scalar_select %p207, %s16, 1
        %p209 = scmp.lt.s32.totalorder %s19, 0
        %s210 = scalar_select %p209, %s19, 0
        %s211 = sadd.s32 %s210, %s208
        %s212 = smul.addr %s206, 2
        %s213 = sadd.s32 %s211, %s212
        %s214 = sadd.s32 %s213, 8
        %s215 = smul.addr %s214, 8
        %s216 = scalar_lea.vmem %s2, %s215
      $region28: #{self_attention_forward.6} parent=15 // pred_fallthru
        _
    $region16: #{self_attention_forward.6} parent=5 // pred_fallthru
      _
    %p217 = scmp.le.s32.totalorder 1, %s9
    %p218 = scmp.lt.s32.totalorder %s9, 5
    %p219 = pnand %p217, %p218
    %p220 = pneg %p219
    // Predicated region
    $region29: #{self_attention_forward.6} parent=5 // pred_check
      _
    $region30: #{self_attention_forward.6} parent=5 // pred_check_branch
      %222 = sbr.rel (%p219) target = $region32
    $region31: #{self_attention_forward.6} parent=5 // pred_region
      %s223 = ssub.s32 %s9, 1
      %p224 = scmp.lt.s32.totalorder %s20, 1
      %s225 = scalar_select %p224, %s20, 1
      %p226 = scmp.lt.s32.totalorder %s21, 1
      %s227 = scalar_select %p226, %s21, 1
      %p228 = scmp.lt.s32.totalorder %s22, 0
      %s229 = scalar_select %p228, %s22, 0
      %s230 = sadd.s32 %s229, %s227
      %s231 = smul.addr %s225, 2
      %s232 = sadd.s32 %s230, %s231
      %s233 = smul.addr %s232, 8
      %s234 = scalar_lea.vmem %s0, %s233
      %p235 = pneg %p65
      %p236 = pneg %p62
      %p237 = scmp.lt.s32.totalorder %s20, 1
      %s238 = scalar_select %p237, %s20, 1
      %p239 = scmp.lt.s32.totalorder %s21, 1
      %s240 = scalar_select %p239, %s21, 1
      %p241 = scmp.lt.s32.totalorder %s23, 0
      %s242 = scalar_select %p241, %s23, 0
      %s243 = sadd.s32 %s242, %s240
      %s244 = smul.addr %s238, 2
      %s245 = sadd.s32 %s243, %s244
      %s246 = smul.addr %s245, 8
      %s247 = scalar_lea.vmem %s1, %s246
      %p248 = pneg %p95
      %p249 = pneg %p92
      %p250 = scmp.lt.s32.totalorder %s21, 1
      %s251 = scalar_select %p250, %s21, 1
      %p252 = scmp.lt.s32.totalorder %s20, 1
      %s253 = scalar_select %p252, %s20, 1
      %p254 = scmp.lt.s32.totalorder %s23, 0
      %s255 = scalar_select %p254, %s23, 0
      %s256 = sadd.s32 %s255, %s253
      %s257 = smul.addr %s251, 2
      %s258 = sadd.s32 %s256, %s257
      %s259 = sadd.s32 %s258, 8
      %s260 = smul.addr %s259, 8
      %s261 = scalar_lea.vmem %s2, %s260
      %p262 = pneg %p125
      %p263 = pneg %p122
      %p264 = pneg %p155
      %p265 = pneg %p152
      %p266 = scmp.lt.s32.totalorder %s20, 1
      %s267 = scalar_select %p266, %s20, 1
      %p268 = scmp.lt.s32.totalorder %s21, 1
      %s269 = scalar_select %p268, %s21, 1
      %p270 = scmp.lt.s32.totalorder %s22, 0
      %s271 = scalar_select %p270, %s22, 0
      %s272 = sadd.s32 %s271, %s269
      %s273 = smul.addr %s267, 2
      %s274 = sadd.s32 %s272, %s273
      %s275 = smul.addr %s274, 8
      %s276 = scalar_lea.vmem %s3, %s275
      %p277 = scmp.lt.s32.totalorder %s20, 1
      %s278 = scalar_select %p277, %s20, 1
      %p279 = scmp.lt.s32.totalorder %s21, 1
      %s280 = scalar_select %p279, %s21, 1
      %p281 = scmp.lt.s32.totalorder %s22, 0
      %s282 = scalar_select %p281, %s22, 0
      %s283 = sadd.s32 %s282, %s280
      %s284 = smul.addr %s278, 2
      %s285 = sadd.s32 %s283, %s284
      %s286 = smul.addr %s285, 8
      %s287 = scalar_lea.vmem %s0, %s286
      %p288 = scmp.lt.s32.totalorder %s20, 1
      %s289 = scalar_select %p288, %s20, 1
      %p290 = scmp.lt.s32.totalorder %s21, 1
      %s291 = scalar_select %p290, %s21, 1
      %p292 = scmp.lt.s32.totalorder %s23, 0
      %s293 = scalar_select %p292, %s23, 0
      %s294 = sadd.s32 %s293, %s291
      %s295 = smul.addr %s289, 2
      %s296 = sadd.s32 %s294, %s295
      %s297 = smul.addr %s296, 8
      %s298 = scalar_lea.vmem %s1, %s297
      %p299 = scmp.lt.s32.totalorder %s21, 1
      %s300 = scalar_select %p299, %s21, 1
      %p301 = scmp.lt.s32.totalorder %s20, 1
      %s302 = scalar_select %p301, %s20, 1
      %p303 = scmp.lt.s32.totalorder %s23, 0
      %s304 = scalar_select %p303, %s23, 0
      %s305 = sadd.s32 %s304, %s302
      %s306 = smul.addr %s300, 2
      %s307 = sadd.s32 %s305, %s306
      %s308 = sadd.s32 %s307, 8
      %s309 = smul.addr %s308, 8
      %s310 = scalar_lea.vmem %s2, %s309
      %p311 = scmp.lt.s32.totalorder %s20, 1
      %s312 = scalar_select %p311, %s20, 1
      %p313 = scmp.lt.s32.totalorder %s21, 1
      %s314 = scalar_select %p313, %s21, 1
      %p315 = scmp.lt.s32.totalorder %s22, 0
      %s316 = scalar_select %p315, %s22, 0
      %s317 = sadd.s32 %s316, %s314
      %s318 = smul.addr %s312, 2
      %s319 = sadd.s32 %s317, %s318
      %s320 = smul.addr %s319, 8
      %s321 = scalar_lea.vmem %s3, %s320
      %p322 = scmp.eq.s32.totalorder %s23, 0
      // Predicated region
      $region33: #{self_attention_forward.6} parent=31 // pred_check
        %p323 = pneg %p322
      $region34: #{self_attention_forward.6} parent=31 // pred_check_branch
        %325 = sbr.rel (%p323) target = $region36
      $region35: #{self_attention_forward.6} parent=31 // pred_region
        %vm326 = vcmask 7168
        %327 = vst.msk [vmem:[#allocation2] sm:$0xff] %vm326, -inf
        %328 = vst.msk [vmem:[#allocation3] sm:$0xff] %vm326, 0.0
        %vm329 = vcmask 130048
        %330 = vst.msk [vmem:[#allocation4] sm:$0xff] %vm329, 0.0
      $region36: #{self_attention_forward.6} parent=31 // pred_fallthru
        _
      %v331 = vld [vmem:[%s287] sm:$0xff]
      %v332 = vld [vmem:[%s298] sm:$0xff]
      %vm333 = vcmask 130048
      %v335 = vsel %vm333, %v331, 0
      %v338 = vsel %vm333, %v332, 0
      %340 = vmatprep.subr.mxu0 0.0
      %341 = vmatpush1.xpose.msra.mxu0 %v338
      %342 = vmatprep.subr.mxu0 0.0
      %343 = vmatpush1.xpose.msra.mxu0 0.0
      %344 = vmatprep.subr.mxu0 0.0
      %345 = vmatpush1.xpose.msra.mxu0 0.0
      %346 = vmatprep.subr.mxu0 0.0
      %347 = vmatpush1.xpose.msra.mxu0 0.0
      %348 = vmatprep.subr.mxu0 0.0
      %349 = vmatpush1.xpose.msra.mxu0 0.0
      %350 = vmatprep.subr.mxu0 0.0
      %351 = vmatpush1.xpose.msra.mxu0 0.0
      %352 = vmatprep.subr.mxu0 0.0
      %353 = vmatpush1.xpose.msra.mxu0 0.0
      %354 = vmatprep.subr.mxu0 0.0
      %355 = vmatpush1.xpose.msra.mxu0 0.0
      %356 = vmatprep.subr.mxu0 0.0
      %357 = vmatpush1.xpose.msra.mxu0 0.0
      %358 = vmatprep.subr.mxu0 0.0
      %359 = vmatpush1.xpose.msra.mxu0 0.0
      %360 = vmatprep.subr.mxu0 0.0
      %361 = vmatpush1.xpose.msra.mxu0 0.0
      %362 = vmatprep.subr.mxu0 0.0
      %363 = vmatpush1.xpose.msra.mxu0 0.0
      %364 = vmatprep.subr.mxu0 0.0
      %365 = vmatpush1.xpose.msra.mxu0 0.0
      %366 = vmatprep.subr.mxu0 0.0
      %367 = vmatpush1.xpose.msra.mxu0 0.0
      %368 = vmatprep.subr.mxu0 0.0
      %369 = vmatpush1.xpose.msra.mxu0 0.0
      %370 = vmatprep.subr.mxu0 0.0
      %371 = vmatpush1.xpose.msra.mxu0 0.0
      %372 = vmatprep.subr.mxu0 0.0
      %373 = vmatpush1.xpose.msra.mxu0 0.0
      %374 = vmatprep.subr.mxu0 0.0
      %375 = vmatpush1.xpose.msra.mxu0 0.0
      %376 = vmatprep.subr.mxu0 0.0
      %377 = vmatpush1.xpose.msra.mxu0 0.0
      %378 = vmatprep.subr.mxu0 0.0
      %379 = vmatpush1.xpose.msra.mxu0 0.0
      %380 = vmatprep.subr.mxu0 0.0
      %381 = vmatpush1.xpose.msra.mxu0 0.0
      %382 = vmatprep.subr.mxu0 0.0
      %383 = vmatpush1.xpose.msra.mxu0 0.0
      %384 = vmatprep.subr.mxu0 0.0
      %385 = vmatpush1.xpose.msra.mxu0 0.0
      %386 = vmatprep.subr.mxu0 0.0
      %387 = vmatpush1.xpose.msra.mxu0 0.0
      %388 = vmatprep.subr.mxu0 0.0
      %389 = vmatpush1.xpose.msra.mxu0 0.0
      %390 = vmatprep.subr.mxu0 0.0
      %391 = vmatpush1.xpose.msra.mxu0 0.0
      %392 = vmatprep.subr.mxu0 0.0
      %393 = vmatpush1.xpose.msra.mxu0 0.0
      %394 = vmatprep.subr.mxu0 0.0
      %395 = vmatpush1.xpose.msra.mxu0 0.0
      %396 = vmatprep.subr.mxu0 0.0
      %397 = vmatpush1.xpose.msra.mxu0 0.0
      %398 = vmatprep.subr.mxu0 0.0
      %399 = vmatpush1.xpose.msra.mxu0 0.0
      %400 = vmatprep.subr.mxu0 0.0
      %401 = vmatpush1.xpose.msra.mxu0 0.0
      %402 = vmatprep.subr.mxu0 0.0
      %403 = vmatpush1.xpose.msra.mxu0 0.0
      %404 = vmatprep.mubr.f32.mxu0 0.0
      %405 = vmatmul.mubr.f32.gmra.mrb[0].mxu0 %v335
      %v406 = vpop.f32.mrb[0].mxu0
      %v407 = vadd.f32 0.0, %v406
      %v408 = vpop.f32.mrb[0].mxu0
      %409 = vdwg.mxu0
      %v410 = vld [vmem:[#allocation2] sm:$0xff]
      %vm411 = vcmask 64512
      %v412 = vsel %vm411, %v407, -inf
      %413 = vmax.xlane.f32.xlu0 %v412
      %v414 = vpop.xlane.xlu0 %413
      %v415 = vmax.f32 %v410, %v414
      %v416 = vsub.f32 %v410, %v415
      %v417 = vmul.f32 %v416, 1.442695
      %v418 = vpow.pop %v417
      %420 = vset.pattern.permute.xlu0 0
      %421 = vperm.xlu0 %420, %v415
      %v422 = vpop.permute.xlu0 %421
      %v424 = vsub.f32 %v407, %v422
      %v425 = vmul.f32 %v424, 1.442695
      %v426 = vpow.pop %v425
      %v427 = vld [vmem:[#allocation3] sm:$0xff]
      %v428 = vmul.f32 %v418, %v427
      %v429 = vsel %vm411, %v426, 0.0
      %430 = vadd.xlane.f32.xlu0 %v429
      %v431 = vpop.xlane.xlu0 %430
      %v432 = vadd.f32 %v428, %v431
      %vm433 = vcmask 7168
      %434 = vst.msk [vmem:[#allocation3] sm:$0xff] %vm433, %v432
      %v435 = vld [vmem:[#allocation4] sm:$0xff]
      %437 = vset.pattern.permute.xlu0 0
      %438 = vperm.xlu0 %437, %v418
      %v439 = vpop.permute.xlu0 %438
      %v441 = vmul.f32 %v439, %v435
      %v442 = vld [vmem:[%s310] sm:$0xff]
      %v444 = vsel %vm411, %v426, 0
      %446 = vmatprep.subr.mxu0 0.0
      %447 = vmatpush1.msra.mxu0 %v442
      %448 = vmatprep.subr.mxu0 0.0
      %449 = vmatpush1.msra.mxu0 0.0
      %450 = vmatprep.subr.mxu0 0.0
      %451 = vmatpush1.msra.mxu0 0.0
      %452 = vmatprep.subr.mxu0 0.0
      %453 = vmatpush1.msra.mxu0 0.0
      %454 = vmatprep.subr.mxu0 0.0
      %455 = vmatpush1.msra.mxu0 0.0
      %456 = vmatprep.subr.mxu0 0.0
      %457 = vmatpush1.msra.mxu0 0.0
      %458 = vmatprep.subr.mxu0 0.0
      %459 = vmatpush1.msra.mxu0 0.0
      %460 = vmatprep.subr.mxu0 0.0
      %461 = vmatpush1.msra.mxu0 0.0
      %462 = vmatprep.subr.mxu0 0.0
      %463 = vmatpush1.msra.mxu0 0.0
      %464 = vmatprep.subr.mxu0 0.0
      %465 = vmatpush1.msra.mxu0 0.0
      %466 = vmatprep.subr.mxu0 0.0
      %467 = vmatpush1.msra.mxu0 0.0
      %468 = vmatprep.subr.mxu0 0.0
      %469 = vmatpush1.msra.mxu0 0.0
      %470 = vmatprep.subr.mxu0 0.0
      %471 = vmatpush1.msra.mxu0 0.0
      %472 = vmatprep.subr.mxu0 0.0
      %473 = vmatpush1.msra.mxu0 0.0
      %474 = vmatprep.subr.mxu0 0.0
      %475 = vmatpush1.msra.mxu0 0.0
      %476 = vmatprep.subr.mxu0 0.0
      %477 = vmatpush1.msra.mxu0 0.0
      %478 = vmatprep.subr.mxu0 0.0
      %479 = vmatpush1.msra.mxu0 0.0
      %480 = vmatprep.subr.mxu0 0.0
      %481 = vmatpush1.msra.mxu0 0.0
      %482 = vmatprep.subr.mxu0 0.0
      %483 = vmatpush1.msra.mxu0 0.0
      %484 = vmatprep.subr.mxu0 0.0
      %485 = vmatpush1.msra.mxu0 0.0
      %486 = vmatprep.subr.mxu0 0.0
      %487 = vmatpush1.msra.mxu0 0.0
      %488 = vmatprep.subr.mxu0 0.0
      %489 = vmatpush1.msra.mxu0 0.0
      %490 = vmatprep.subr.mxu0 0.0
      %491 = vmatpush1.msra.mxu0 0.0
      %492 = vmatprep.subr.mxu0 0.0
      %493 = vmatpush1.msra.mxu0 0.0
      %494 = vmatprep.subr.mxu0 0.0
      %495 = vmatpush1.msra.mxu0 0.0
      %496 = vmatprep.subr.mxu0 0.0
      %497 = vmatpush1.msra.mxu0 0.0
      %498 = vmatprep.subr.mxu0 0.0
      %499 = vmatpush1.msra.mxu0 0.0
      %500 = vmatprep.subr.mxu0 0.0
      %501 = vmatpush1.msra.mxu0 0.0
      %502 = vmatprep.subr.mxu0 0.0
      %503 = vmatpush1.msra.mxu0 0.0
      %504 = vmatprep.subr.mxu0 0.0
      %505 = vmatpush1.msra.mxu0 0.0
      %506 = vmatprep.subr.mxu0 0.0
      %507 = vmatpush1.msra.mxu0 0.0
      %508 = vmatprep.subr.mxu0 0.0
      %509 = vmatpush1.msra.mxu0 0.0
      %510 = vmatprep.mubr.f32.mxu0 0.0
      %511 = vmatmul.mubr.f32.gmra.mrb[0].mxu0 %v444
      %v512 = vpop.f32.mrb[0].mxu0
      %v513 = vadd.f32 0.0, %v512
      %v514 = vpop.f32.mrb[0].mxu0
      %515 = vdwg.mxu0
      %v516 = vadd.f32 %v441, %v513
      %517 = vst.msk [vmem:[#allocation4] sm:$0xff] %vm333, %v516
      %518 = vst.msk [vmem:[#allocation2] sm:$0xff] %vm433, %v415
      // Predicated region
      $region37: #{self_attention_forward.6} parent=31 // pred_check
        %p519 = pneg %p322
      $region38: #{self_attention_forward.6} parent=31 // pred_check_branch
        %521 = sbr.rel (%p519) target = $region40
      $region39: #{self_attention_forward.6} parent=31 // pred_region
        %v522 = vld [vmem:[#allocation4] sm:$0xff]
        %v523 = vld [vmem:[#allocation3] sm:$0xff]
        %525 = vset.pattern.permute.xlu0 0
        %526 = vperm.xlu0 %525, %v523
        %v527 = vpop.permute.xlu0 %526
        %v529 = vrcp.pop %v527
        %v530 = vmul.f32 %v522, %v529
        %531 = vst.msk [vmem:[%s321] sm:$0xff] %vm333, %v530
      $region40: #{self_attention_forward.6} parent=31 // pred_fallthru
        _
      %p532 = scmp.lt.s32.totalorder %s20, 1
      %s533 = scalar_select %p532, %s20, 1
      %p534 = scmp.lt.s32.totalorder %s21, 1
      %s535 = scalar_select %p534, %s21, 1
      %p536 = scmp.lt.s32.totalorder %s22, 0
      %s537 = scalar_select %p536, %s22, 0
      %s538 = sadd.s32 %s537, %s535
      %s539 = smul.addr %s533, 2
      %s540 = sadd.s32 %s538, %s539
      %s541 = smul.addr %s540, 8
      %s542 = scalar_lea.vmem %s3, %s541
      // Predicated region
      $region41: #{self_attention_forward.6} parent=31 // pred_check
        %p543 = pneg %p152
      $region42: #{self_attention_forward.6} parent=31 // pred_check_branch
        %545 = sbr.rel (%p543) target = $region44
      $region43: #{self_attention_forward.6} parent=31 // pred_region
        _
      $region44: #{self_attention_forward.6} parent=31 // pred_fallthru
        _
    $region32: #{self_attention_forward.6} parent=5 // pred_fallthru
      _
    %p546 = scmp.le.s32.totalorder 2, %s9
    // Predicated region
    $region45: #{self_attention_forward.6} parent=5 // pred_check
      %p547 = pneg %p546
    $region46: #{self_attention_forward.6} parent=5 // pred_check_branch
      %549 = sbr.rel (%p547) target = $region48
    $region47: #{self_attention_forward.6} parent=5 // pred_region
      %s550 = ssub.s32 %s9, 2
      // Predicated region
      $region49: #{self_attention_forward.6} parent=47 // pred_check
        %p551 = pneg %p158
      $region50: #{self_attention_forward.6} parent=47 // pred_check_branch
        %553 = sbr.rel (%p551) target = $region52
      $region51: #{self_attention_forward.6} parent=47 // pred_region
        %p554 = scmp.lt.s32.totalorder %s24, 1
        %s555 = scalar_select %p554, %s24, 1
        %p556 = scmp.lt.s32.totalorder %s25, 1
        %s557 = scalar_select %p556, %s25, 1
        %p558 = scmp.lt.s32.totalorder %s26, 0
        %s559 = scalar_select %p558, %s26, 0
        %s560 = sadd.s32 %s559, %s557
        %s561 = smul.addr %s555, 2
        %s562 = sadd.s32 %s560, %s561
        %s563 = smul.addr %s562, 8
        %s564 = scalar_lea.vmem %s3, %s563
      $region52: #{self_attention_forward.6} parent=47 // pred_fallthru
        _
    $region48: #{self_attention_forward.6} parent=5 // pred_fallthru
      _
  $region6: #{self_attention_forward.6} parent=0 // loop_footer
    %s13 = sadd.s32 1, %s9
  $region7: #{self_attention_forward.6} parent=0 // loop_footer_branch
    %8 = sbr.rel target = $region3
  $region8: #{self_attention_forward.6} parent=0 // loop_exit
    _

// kernel: self_attention_forward.7
$region0: #{self_attention_forward.7}
  #allocation0 [shape = 'u32[]', space=smem, size = 0x4, offset = 0x4, fixed_abs, tag = 'smem constant byte address 0x4 - core index']
  #allocation1 [shape = 'u32[144,128]{1,0:T(1,128)}', space=vmem, size = 0x12000, scoped, tag = 'internal scratch']
  #allocation2 [shape = 'f32[8,32]{1,0:T(8,128)}', space=vmem, size = 0x1000, scoped, tag = 'scratch operand']
  %s0 = inlined_call_operand.vmem [shape: f32[2,2,8,16], index: 0, kind: input, shape index: {}]
  %s1 = inlined_call_operand.vmem [shape: f32[2,16,32], index: 1, kind: input, shape index: {}]
  %s2 = inlined_call_operand.vmem [shape: f32[1,32], index: 2, kind: input, shape index: {}]
  %s3 = inlined_call_operand.hbm [shape: f32[2,8,32], index: 3, kind: output, shape index: {}]
  %s4 = sld [smem:[#allocation0]]
  $region53: #{self_attention_forward.7} parent=0
    _
  %s6 = ssub.s32 1, %s4
  %s7 = scalar_select 0, %s6, %s4
  $region1: #{self_attention_forward.7} parent=0
    #allocation3 [shape = 'u8[8192]{0}', space=vmem, size = 0x2000, scoped, tag = 'output window, operand 0']
    #allocation4 [shape = 's32[2]{0}', space=sflag, size = 0x8, scoped, tag = 'scoped memory for self_attention_forward.7']
    %8 = vsyncpa [#allocation4], 0
    %s9 = scalar_lea.sflag [#allocation4], 1
    %10 = vsyncpa %s9, 0
    loop: start=0, step=1, limit=6
    $region2: #{self_attention_forward.7} parent=1 // loop_pre_header
      _
    $region3: #{self_attention_forward.7} parent=1 // loop_header
      %s12 = sphi 0, %s16
      %p13 = scmp.ge.s32.totalorder %s12, 6
      %s19 = sphi 0, %s45
      %s20 = sphi 0, %s41
      %s21 = sphi 0, %s37
      %s22 = sphi 0, %s33
      %s23 = sphi 0, %s19
      %s24 = sphi 0, %s20
      %s25 = sphi 0, %s21
      %s26 = sphi 0, %s22
      %s27 = sphi 0, %s23
      %s28 = sphi 0, %s24
      %s29 = sphi 0, %s25
      %s30 = sphi 0, %s26
      %s52 = sphi 0, %s54
      %s55 = sphi 0, %s52
      %s56 = sphi 0, %s55
      %s72 = sphi 0, %s56
      %s80 = sphi 0, %s82
      %s83 = sphi 0, %s80
      %s84 = sphi 0, %s83
      %s100 = sphi 0, %s84
      %s106 = sphi 0, %s108
      %s109 = sphi 0, %s106
      %s110 = sphi 0, %s109
      %s126 = sphi 0, %s110
      %s136 = sphi 0, %s138
      %s139 = sphi 0, %s136
      %s140 = sphi 0, %s139
      %s156 = sphi 0, %s140
    $region4: #{self_attention_forward.7} parent=1 // loop_header_branch
      %15 = sbr.rel (%p13) target = $region8
    $region5: #{self_attention_forward.7} parent=1 // loop_body
      %s17 = ssub.s32 %s12, 1
      %s18 = ssub.s32 %s12, 2
      %s31 = sadd.s32 1, %s22
      %p32 = scmp.ge.s32.totalorder %s31, 2
      %s33 = scalar_select %p32, 0, %s31
      %s34 = sadd.s32 1, %s21
      %s35 = scalar_select %p32, %s34, %s21
      %p36 = scmp.ge.s32.totalorder %s35, 1
      %s37 = scalar_select %p36, 0, %s35
      %s38 = sadd.s32 1, %s20
      %s39 = scalar_select %p36, %s38, %s20
      %p40 = scmp.ge.s32.totalorder %s39, 1
      %s41 = scalar_select %p40, 0, %s39
      %s42 = sadd.s32 1, %s19
      %s43 = scalar_select %p40, %s42, %s19
      %p44 = scmp.ge.s32.totalorder %s43, 2
      %s45 = scalar_select %p44, 0, %s43
      %s46 = ssub.s32 %s19, %s45
      %s47 = ssub.s32 %s22, %s33
      %s48 = sor.u32 %s46, %s47
      %s49 = ssub.s32 %s20, %s41
      %s50 = sor.u32 %s48, %s49
      %p51 = scmp.eq.s32.totalorder %s50, 0
      %s53 = sadd.s32 %s52, 1
      %s54 = scalar_select %p51, %s52, %s53
      %p57 = pneg %p51
      %p58 = scmp.eq.s32.totalorder %s12, 3
      %p59 = por %p57, %p58
      %p60 = scmp.ne.s32.totalorder %s52, %s55
      %p61 = scmp.eq.s32.totalorder %s12, 0
      %p62 = por %p60, %p61
      %p63 = scmp.ne.s32.totalorder %s52, %s55
      %p64 = scmp.eq.s32.totalorder %s17, 3
      %p65 = por %p63, %p64
      %p66 = scmp.ne.s32.totalorder %s55, %s56
      %p67 = scmp.eq.s32.totalorder %s17, 0
      %p68 = por %p66, %p67
      %p69 = scmp.ne.s32.totalorder %s55, %s56
      %p70 = scmp.eq.s32.totalorder %s18, 3
      %p71 = por %p69, %p70
      %p73 = scmp.ne.s32.totalorder %s56, %s72
      %p74 = scmp.eq.s32.totalorder %s18, 0
      %p75 = por %p73, %p74
      %s76 = ssub.s32 %s22, %s33
      %s77 = ssub.s32 %s21, %s37
      %s78 = sor.u32 %s76, %s77
      %p79 = scmp.eq.s32.totalorder %s78, 0
      %s81 = sadd.s32 %s80, 1
      %s82 = scalar_select %p79, %s80, %s81
      %p85 = pneg %p79
      %p86 = scmp.eq.s32.totalorder %s12, 3
      %p87 = por %p85, %p86
      %p88 = scmp.ne.s32.totalorder %s80, %s83
      %p89 = scmp.eq.s32.totalorder %s12, 0
      %p90 = por %p88, %p89
      %p91 = scmp.ne.s32.totalorder %s80, %s83
      %p92 = scmp.eq.s32.totalorder %s17, 3
      %p93 = por %p91, %p92
      %p94 = scmp.ne.s32.totalorder %s83, %s84
      %p95 = scmp.eq.s32.totalorder %s17, 0
      %p96 = por %p94, %p95
      %p97 = scmp.ne.s32.totalorder %s83, %s84
      %p98 = scmp.eq.s32.totalorder %s18, 3
      %p99 = por %p97, %p98
      %p101 = scmp.ne.s32.totalorder %s84, %s100
      %p102 = scmp.eq.s32.totalorder %s18, 0
      %p103 = por %p101, %p102
      %s104 = ssub.s32 %s21, %s37
      %p105 = scmp.eq.s32.totalorder %s104, 0
      %s107 = sadd.s32 %s106, 1
      %s108 = scalar_select %p105, %s106, %s107
      %p111 = pneg %p105
      %p112 = scmp.eq.s32.totalorder %s12, 3
      %p113 = por %p111, %p112
      %p114 = scmp.ne.s32.totalorder %s106, %s109
      %p115 = scmp.eq.s32.totalorder %s12, 0
      %p116 = por %p114, %p115
      %p117 = scmp.ne.s32.totalorder %s106, %s109
      %p118 = scmp.eq.s32.totalorder %s17, 3
      %p119 = por %p117, %p118
      %p120 = scmp.ne.s32.totalorder %s109, %s110
      %p121 = scmp.eq.s32.totalorder %s17, 0
      %p122 = por %p120, %p121
      %p123 = scmp.ne.s32.totalorder %s109, %s110
      %p124 = scmp.eq.s32.totalorder %s18, 3
      %p125 = por %p123, %p124
      %p127 = scmp.ne.s32.totalorder %s110, %s126
      %p128 = scmp.eq.s32.totalorder %s18, 0
      %p129 = por %p127, %p128
      %s130 = ssub.s32 %s19, %s45
      %s131 = ssub.s32 %s20, %s41
      %s132 = sor.u32 %s130, %s131
      %s133 = ssub.s32 %s21, %s37
      %s134 = sor.u32 %s132, %s133
      %p135 = scmp.eq.s32.totalorder %s134, 0
      %s137 = sadd.s32 %s136, 1
      %s138 = scalar_select %p135, %s136, %s137
      %p141 = pneg %p135
      %p142 = scmp.eq.s32.totalorder %s12, 3
      %p143 = por %p141, %p142
      %p144 = scmp.ne.s32.totalorder %s136, %s139
      %p145 = scmp.eq.s32.totalorder %s12, 0
      %p146 = por %p144, %p145
      %p147 = scmp.ne.s32.totalorder %s136, %s139
      %p148 = scmp.eq.s32.totalorder %s17, 3
      %p149 = por %p147, %p148
      %p150 = scmp.ne.s32.totalorder %s139, %s140
      %p151 = scmp.eq.s32.totalorder %s17, 0
      %p152 = por %p150, %p151
      %p153 = scmp.ne.s32.totalorder %s139, %s140
      %p154 = scmp.eq.s32.totalorder %s18, 3
      %p155 = por %p153, %p154
      %p157 = scmp.ne.s32.totalorder %s140, %s156
      %p158 = scmp.eq.s32.totalorder %s18, 0
      %p159 = por %p157, %p158
      %p160 = scmp.le.s32.totalorder 1, %s12
      %p161 = scmp.lt.s32.totalorder %s12, 5
      %p162 = pnand %p160, %p161
      %p163 = pneg %p162
      // Predicated region
      $region9: #{self_attention_forward.7} parent=5 // pred_check
        _
      $region10: #{self_attention_forward.7} parent=5 // pred_check_branch
        %165 = sbr.rel (%p162) target = $region12
      $region11: #{self_attention_forward.7} parent=5 // pred_region
        %s166 = ssub.s32 %s12, 1
        // Predicated region
        $region13: #{self_attention_forward.7} parent=11 // pred_check
          %p167 = pneg %p122
        $region14: #{self_attention_forward.7} parent=11 // pred_check_branch
          %169 = sbr.rel (%p167) target = $region16
        $region15: #{self_attention_forward.7} parent=11 // pred_region
          %p170 = scmp.lt.s32.totalorder %s25, 0
          %s171 = scalar_select %p170, %s25, 0
          %s172 = scalar_lea.vmem %s2, %s171
        $region16: #{self_attention_forward.7} parent=11 // pred_fallthru
          _
      $region12: #{self_attention_forward.7} parent=5 // pred_fallthru
        _
      %p173 = scmp.lt.s32.totalorder %s12, 4
      // Predicated region
      $region17: #{self_attention_forward.7} parent=5 // pred_check
        %p174 = pneg %p173
      $region18: #{self_attention_forward.7} parent=5 // pred_check_branch
        %176 = sbr.rel (%p174) target = $region20
      $region19: #{self_attention_forward.7} parent=5 // pred_region
        // Predicated region
        $region21: #{self_attention_forward.7} parent=19 // pred_check
          %p177 = pneg %p62
        $region22: #{self_attention_forward.7} parent=19 // pred_check_branch
          %179 = sbr.rel (%p177) target = $region24
        $region23: #{self_attention_forward.7} parent=19 // pred_region
          %p180 = scmp.lt.s32.totalorder %s19, 1
          %s181 = scalar_select %p180, %s19, 1
          %p182 = scmp.lt.s32.totalorder %s22, 1
          %s183 = scalar_select %p182, %s22, 1
          %p184 = scmp.lt.s32.totalorder %s20, 0
          %s185 = scalar_select %p184, %s20, 0
          %s186 = sadd.s32 %s185, %s183
          %s187 = smul.addr %s181, 2
          %s188 = sadd.s32 %s186, %s187
          %s189 = smul.addr %s188, 8
          %s190 = scalar_lea.vmem %s0, %s189
        $region24: #{self_attention_forward.7} parent=19 // pred_fallthru
          _
        // Predicated region
        $region25: #{self_attention_forward.7} parent=19 // pred_check
          %p191 = pneg %p90
        $region26: #{self_attention_forward.7} parent=19 // pred_check_branch
          %193 = sbr.rel (%p191) target = $region28
        $region27: #{self_attention_forward.7} parent=19 // pred_region
          %p194 = scmp.lt.s32.totalorder %s22, 1
          %s195 = scalar_select %p194, %s22, 1
          %p196 = scmp.lt.s32.totalorder %s21, 0
          %s197 = scalar_select %p196, %s21, 0
          %s198 = smul.addr %s195, 2
          %s199 = sadd.s32 %s197, %s198
          %s200 = smul.addr %s199, 8
          %s201 = scalar_lea.vmem %s1, %s200
        $region28: #{self_attention_forward.7} parent=19 // pred_fallthru
          _
      $region20: #{self_attention_forward.7} parent=5 // pred_fallthru
        _
      %p202 = scmp.le.s32.totalorder 1, %s12
      %p203 = scmp.lt.s32.totalorder %s12, 5
      %p204 = pnand %p202, %p203
      %p205 = pneg %p204
      // Predicated region
      $region29: #{self_attention_forward.7} parent=5 // pred_check
        _
      $region30: #{self_attention_forward.7} parent=5 // pred_check_branch
        %207 = sbr.rel (%p204) target = $region32
      $region31: #{self_attention_forward.7} parent=5 // pred_region
        %s208 = ssub.s32 %s12, 1
        %p209 = scmp.lt.s32.totalorder %s23, 1
        %s210 = scalar_select %p209, %s23, 1
        %p211 = scmp.lt.s32.totalorder %s26, 1
        %s212 = scalar_select %p211, %s26, 1
        %p213 = scmp.lt.s32.totalorder %s24, 0
        %s214 = scalar_select %p213, %s24, 0
        %s215 = sadd.s32 %s214, %s212
        %s216 = smul.addr %s210, 2
        %s217 = sadd.s32 %s215, %s216
        %s218 = smul.addr %s217, 8
        %s219 = scalar_lea.vmem %s0, %s218
        %p220 = pneg %p68
        %p221 = pneg %p65
        %p222 = scmp.lt.s32.totalorder %s26, 1
        %s223 = scalar_select %p222, %s26, 1
        %p224 = scmp.lt.s32.totalorder %s25, 0
        %s225 = scalar_select %p224, %s25, 0
        %s226 = smul.addr %s223, 2
        %s227 = sadd.s32 %s225, %s226
        %s228 = smul.addr %s227, 8
        %s229 = scalar_lea.vmem %s1, %s228
        %p230 = pneg %p96
        %p231 = pneg %p93
        %p232 = scmp.lt.s32.totalorder %s25, 0
        %s233 = scalar_select %p232, %s25, 0
        %s234 = scalar_lea.vmem %s2, %s233
        %p235 = pneg %p122
        %p236 = pneg %p119
        %p237 = pneg %p152
        %p238 = pneg %p149
        %s239 = sand.u32 %s139, 1
        %s240 = scalar_lea.sflag [#allocation4], %s239
        %s241 = sand.u32 %s139, 1
        %s242 = smul.addr %s241, 8
        %s243 = scalar_lea.vmem [#allocation3], %s242
        %p244 = scmp.lt.s32.totalorder %s23, 1
        %s245 = scalar_select %p244, %s23, 1
        %p246 = scmp.lt.s32.totalorder %s26, 1
        %s247 = scalar_select %p246, %s26, 1
        %p248 = scmp.lt.s32.totalorder %s24, 0
        %s249 = scalar_select %p248, %s24, 0
        %s250 = sadd.s32 %s249, %s247
        %s251 = smul.addr %s245, 2
        %s252 = sadd.s32 %s250, %s251
        %s253 = smul.addr %s252, 8
        %s254 = scalar_lea.vmem %s0, %s253
        %p255 = scmp.lt.s32.totalorder %s26, 1
        %s256 = scalar_select %p255, %s26, 1
        %p257 = scmp.lt.s32.totalorder %s25, 0
        %s258 = scalar_select %p257, %s25, 0
        %s259 = smul.addr %s256, 2
        %s260 = sadd.s32 %s258, %s259
        %s261 = smul.addr %s260, 8
        %s262 = scalar_lea.vmem %s1, %s261
        %p263 = scmp.lt.s32.totalorder %s25, 0
        %s264 = scalar_select %p263, %s25, 0
        %s265 = scalar_lea.vmem %s2, %s264
        %p266 = scmp.eq.s32.totalorder %s26, 0
        // Predicated region
        $region33: #{self_attention_forward.7} parent=31 // pred_check
          %p267 = pneg %p266
        $region34: #{self_attention_forward.7} parent=31 // pred_check_branch
          %269 = sbr.rel (%p267) target = $region36
        $region35: #{self_attention_forward.7} parent=31 // pred_region
          %vm270 = vcmask 261120
          %271 = vst.msk [vmem:[#allocation2] sm:$0xff] %vm270, 0.0
        $region36: #{self_attention_forward.7} parent=31 // pred_fallthru
          _
        %v272 = vld [vmem:[#allocation2] sm:$0xff]
        %v273 = vld [vmem:[%s254] sm:$0xff]
        %v274 = vld [vmem:[%s262] sm:$0xff]
        %v275 = vld [vmem:[%s262 + $0x8] sm:$0xff]
        %vm276 = vcmask 130048
        %v278 = vsel %vm276, %v273, 0
        %280 = vmatprep.subr.mxu0 0.0
        %281 = vmatpush1.msra.mxu0 %v274
        %282 = vmatprep.subr.mxu0 0.0
        %283 = vmatpush1.msra.mxu0 %v275
        %284 = vmatprep.subr.mxu0 0.0
        %285 = vmatpush1.msra.mxu0 0.0
        %286 = vmatprep.subr.mxu0 0.0
        %287 = vmatpush1.msra.mxu0 0.0
        %288 = vmatprep.subr.mxu0 0.0
        %289 = vmatpush1.msra.mxu0 0.0
        %290 = vmatprep.subr.mxu0 0.0
        %291 = vmatpush1.msra.mxu0 0.0
        %292 = vmatprep.subr.mxu0 0.0
        %293 = vmatpush1.msra.mxu0 0.0
        %294 = vmatprep.subr.mxu0 0.0
        %295 = vmatpush1.msra.mxu0 0.0
        %296 = vmatprep.subr.mxu0 0.0
        %297 = vmatpush1.msra.mxu0 0.0
        %298 = vmatprep.subr.mxu0 0.0
        %299 = vmatpush1.msra.mxu0 0.0
        %300 = vmatprep.subr.mxu0 0.0
        %301 = vmatpush1.msra.mxu0 0.0
        %302 = vmatprep.subr.mxu0 0.0
        %303 = vmatpush1.msra.mxu0 0.0
        %304 = vmatprep.subr.mxu0 0.0
        %305 = vmatpush1.msra.mxu0 0.0
        %306 = vmatprep.subr.mxu0 0.0
        %307 = vmatpush1.msra.mxu0 0.0
        %308 = vmatprep.subr.mxu0 0.0
        %309 = vmatpush1.msra.mxu0 0.0
        %310 = vmatprep.subr.mxu0 0.0
        %311 = vmatpush1.msra.mxu0 0.0
        %312 = vmatprep.subr.mxu0 0.0
        %313 = vmatpush1.msra.mxu0 0.0
        %314 = vmatprep.subr.mxu0 0.0
        %315 = vmatpush1.msra.mxu0 0.0
        %316 = vmatprep.subr.mxu0 0.0
        %317 = vmatpush1.msra.mxu0 0.0
        %318 = vmatprep.subr.mxu0 0.0
        %319 = vmatpush1.msra.mxu0 0.0
        %320 = vmatprep.subr.mxu0 0.0
        %321 = vmatpush1.msra.mxu0 0.0
        %322 = vmatprep.subr.mxu0 0.0
        %323 = vmatpush1.msra.mxu0 0.0
        %324 = vmatprep.subr.mxu0 0.0
        %325 = vmatpush1.msra.mxu0 0.0
        %326 = vmatprep.subr.mxu0 0.0
        %327 = vmatpush1.msra.mxu0 0.0
        %328 = vmatprep.subr.mxu0 0.0
        %329 = vmatpush1.msra.mxu0 0.0
        %330 = vmatprep.subr.mxu0 0.0
        %331 = vmatpush1.msra.mxu0 0.0
        %332 = vmatprep.subr.mxu0 0.0
        %333 = vmatpush1.msra.mxu0 0.0
        %334 = vmatprep.subr.mxu0 0.0
        %335 = vmatpush1.msra.mxu0 0.0
        %336 = vmatprep.subr.mxu0 0.0
        %337 = vmatpush1.msra.mxu0 0.0
        %338 = vmatprep.subr.mxu0 0.0
        %339 = vmatpush1.msra.mxu0 0.0
        %340 = vmatprep.subr.mxu0 0.0
        %341 = vmatpush1.msra.mxu0 0.0
        %342 = vmatprep.subr.mxu0 0.0
        %343 = vmatpush1.msra.mxu0 0.0
        %344 = vmatprep.mubr.f32.mxu0 0.0
        %345 = vmatmul.mubr.f32.gmra.mrb[0].mxu0 %v278
        %v346 = vpop.f32.mrb[0].mxu0
        %v347 = vadd.f32 0.0, %v346
        %v348 = vpop.f32.mrb[0].mxu0
        %349 = vdwg.mxu0
        %v350 = vadd.f32 %v272, %v347
        %vm351 = vcmask 261120
        %352 = vst.msk [vmem:[#allocation2] sm:$0xff] %vm351, %v350
        %p353 = scmp.eq.s32.totalorder %s26, 1
        // Predicated region
        $region37: #{self_attention_forward.7} parent=31 // pred_check
          %p354 = pneg %p353
        $region38: #{self_attention_forward.7} parent=31 // pred_check_branch
          %356 = sbr.rel (%p354) target = $region40
        $region39: #{self_attention_forward.7} parent=31 // pred_region
          %v357 = vld [vmem:[#allocation2] sm:$0xff]
          %v358 = vld [vmem:[%s265] sm:$0x1]
          %v360 = vlaneseq
          %v361 = vshrl.u32 %v360, 7
          %v362 = vsub.s32 0, %v361
          %v363 = vrot.slane %v358, %v362
          %v365 = vadd.f32 %v357, %v363
          %366 = vst.msk [vmem:[%s243] sm:$0xff] %vm351, %v365
        $region40: #{self_attention_forward.7} parent=31 // pred_fallthru
          _
        %s367 = sand.u32 %s139, 1
        %s368 = scalar_lea.sflag [#allocation4], %s367
        %s369 = sand.u32 %s139, 1
        %s370 = smul.addr %s369, 8
        %s371 = scalar_lea.vmem [#allocation3], %s370
        // Predicated region
        $region41: #{self_attention_forward.7} parent=31 // pred_check
          %p372 = pneg %p149
        $region42: #{self_attention_forward.7} parent=31 // pred_check_branch
          %374 = sbr.rel (%p372) target = $region44
        $region43: #{self_attention_forward.7} parent=31 // pred_region
          %s376 = ssub.s32 128, 128
          %377 = vsyncadd %s368, %s376
          %s378 = sadd.s32 %s25, %s24
          %s379 = sadd.s32 %s378, %s23
          %s380 = smul.addr %s379, 128
          %s381 = scalar_lea.hbm %s3, %s380
          %s383 = sshll.u32 %s371, 4
          %s384 = int_to_ptr.vmem [resolvable:$true] %s383
          %386 = dma.vmem_to_hbm [thread:$0]  %s384, 128, %s381, %s368
        $region44: #{self_attention_forward.7} parent=31 // pred_fallthru
          _
      $region32: #{self_attention_forward.7} parent=5 // pred_fallthru
        _
      %p387 = scmp.le.s32.totalorder 2, %s12
      // Predicated region
      $region45: #{self_attention_forward.7} parent=5 // pred_check
        %p388 = pneg %p387
      $region46: #{self_attention_forward.7} parent=5 // pred_check_branch
        %390 = sbr.rel (%p388) target = $region48
      $region47: #{self_attention_forward.7} parent=5 // pred_region
        %s391 = ssub.s32 %s12, 2
        // Predicated region
        $region49: #{self_attention_forward.7} parent=47 // pred_check
          %p392 = pneg %p155
        $region50: #{self_attention_forward.7} parent=47 // pred_check_branch
          %394 = sbr.rel (%p392) target = $region52
        $region51: #{self_attention_forward.7} parent=47 // pred_region
          %s395 = sand.u32 %s140, 1
          %s396 = scalar_lea.sflag [#allocation4], %s395
          %s397 = sand.u32 %s140, 1
          %s398 = smul.addr %s397, 8
          %s399 = scalar_lea.vmem [#allocation3], %s398
          %400 = dma.done %s396, 128
        $region52: #{self_attention_forward.7} parent=47 // pred_fallthru
          _
      $region48: #{self_attention_forward.7} parent=5 // pred_fallthru
        _
    $region6: #{self_attention_forward.7} parent=1 // loop_footer
      %s16 = sadd.s32 1, %s12
    $region7: #{self_attention_forward.7} parent=1 // loop_footer_branch
      %11 = sbr.rel target = $region3
    $region8: #{self_attention_forward.7} parent=1 // loop_exit
      _
    %401 = vsyncpa [#allocation4], 1
    %s402 = scalar_lea.sflag [#allocation4], 1
    %403 = vsyncpa %s402, 1

</llo_original>
